<compile_context>
chip_gen: v6e
topology: v6e:2x2x1
jax: 0.10.0
libtpu: 0.0.40
codegen_flags: <defaults>
</compile_context>

<pallas_src>
import functools

import jax
import jax.numpy as jnp
from jax.experimental import pallas as pl
from jax.experimental.pallas import tpu as pltpu


def _global_branch_kernel(x_ref, pe_ref, w_ref, b_ref, bns_ref, bnb_ref,
                          wc_ref, bc_ref, gamma_ref, gm_ref, out_ref,
                          *, C, n_blocks, bt, eps, mxu_dtype):
    """Whole Global_Branch forward for `bt` batch elements, entirely in VMEM.

    Channel-major layout: channels on sublanes, tokens (L = H*W) on lanes.

    x_ref     : (bt, C, L)         input tokens
    pe_ref    : (n_blocks, C, L)   positional embedding per block (pre-transposed)
    w_ref     : (n_blocks, 5C, C)  fused [Q;K;V;Q1;K1] projection weights (W @ x)
    b_ref     : (n_blocks, 5C, 1)  fused projection biases (column vectors)
    bns_ref   : (n_blocks, C, 1)   folded BN scale  = bn_gamma / sqrt(var + eps_bn)
    bnb_ref   : (n_blocks, C, 1)   folded BN bias   = bn_beta - mean * scale
    wc_ref    : (O, C)             1x1 conv head weight
    bc_ref    : (O, 1)             1x1 conv head bias
    gamma_ref : (n_blocks,) SMEM   residual scale gamma per block
    gm_ref    : (bt, O, L)         output: global_map tokens (lane-dense)
    out_ref   : (bt, C, L)         output: blocks(x) + shortcut tokens (lane-dense)
    """

    def mm(a, b, dn=None):
        a = a.astype(mxu_dtype)
        b = b.astype(mxu_dtype)
        if dn is None:
            return jnp.dot(a, b, preferred_element_type=jnp.float32)
        return jax.lax.dot_general(a, b, dimension_numbers=dn,
                                   preferred_element_type=jnp.float32)

    for bb in range(bt):
        x_in = x_ref[bb]                                        # (C, L)
        h = x_in
        for blk in range(n_blocks):
            xp = h + pe_ref[blk]                                # (C, L)

            # One fat MXU matmul for all five projections: (5C, C) @ (C, L).
            proj = mm(w_ref[blk], xp) + b_ref[blk]              # (5C, L)

            # Sublane-aligned row slices (row offsets are multiples of C=32).
            q = jnp.maximum(proj[0 * C:1 * C], 0.0)             # kernel_fun = ReLU
            k = jnp.maximum(proj[1 * C:2 * C], 0.0)
            v = proj[2 * C:3 * C]
            q1 = proj[3 * C:4 * C]
            k1 = proj[4 * C:5 * C]

            # torch.einsum('blc,bcc,bl->blc') only uses the DIAGONAL of KV:
            #   diag(KV)[c] = sum_l K[c,l] * V[c,l]    (lane reduction)
            kv_diag = jnp.sum(k * v, axis=1, keepdims=True)          # (C, 1)
            k_sum = jnp.sum(k, axis=1, keepdims=True) + eps          # (C, 1)
            den = jnp.sum(q * k_sum, axis=0, keepdims=True)          # (1, L)
            res = q * kv_diag * pl.reciprocal(den, approx=True)      # (C, L)

            # mid = softmax(Q1^T @ K1, -1): logits[c,d] = sum_l Q1[c,l]*K1[d,l]
            logits = mm(q1, k1, dn=(((1,), (1,)), ((), ())))         # (C, C)
            mx = jnp.max(logits, axis=-1, keepdims=True)
            ex = jnp.exp(logits - mx)
            mid = ex * pl.reciprocal(jnp.sum(ex, axis=-1, keepdims=True),
                                     approx=True)                    # (C, C)

            # (res @ mid) in token-major == mid^T @ res in channel-major.
            res = mm(mid, res, dn=(((0,), (0,)), ((), ())))          # (C, L)

            h = xp + gamma_ref[blk] * res
            # Folded BatchNorm2d (eval) + ReLU, per channel (per sublane row).
            h = jnp.maximum(h * bns_ref[blk] + bnb_ref[blk], 0.0)

        # 1x1 conv head (per-token linear) + residual with the original input.
        gm = mm(wc_ref[...], h) + bc_ref[...]                        # (O, L)
        gm_ref[bb] = gm.astype(gm_ref.dtype)
        out_ref[bb] = (h + x_in).astype(out_ref.dtype)


def global_branch_forward(x_nchw, params, eps=1e-6, bn_eps=1e-5,
                          mxu_dtype=jnp.float32):
    """Matches Global_Branch.forward: returns (global_map, blocks(x) + shortcut).

    Pass mxu_dtype=jnp.bfloat16 on v6e/v7x once C/L are large enough for the
    kernel to become MXU-bound (re-validate tolerances).
    """
    B, C, H, W = x_nchw.shape
    L = H * W
    blocks = params["blocks"]
    n_blocks = len(blocks)
    assert blocks[0]["pos_emb"].shape == (L, C), "pos_emb length must equal H*W"
    O = params["conv_w"].shape[0]

    # ---- pack / fold parameters for the channel-major kernel (tiny) ------
    pe = jnp.stack([bp["pos_emb"].T for bp in blocks]).astype(jnp.float32)    # (nb,C,L)
    w_cat = jnp.stack([
        jnp.concatenate([bp["wq"], bp["wk"], bp["wv"], bp["wq1"], bp["wk1"]],
                        axis=0)
        for bp in blocks]).astype(jnp.float32)                                # (nb,5C,C)
    b_cat = jnp.stack([
        jnp.concatenate([bp["bq"], bp["bk"], bp["bv"], bp["bq1"], bp["bk1"]])
        for bp in blocks]).astype(jnp.float32)[:, :, None]                    # (nb,5C,1)
    bn_scale = jnp.stack([bp["bn"]["gamma"] / jnp.sqrt(bp["bn"]["var"] + bn_eps)
                          for bp in blocks]).astype(jnp.float32)[:, :, None]  # (nb,C,1)
    bn_bias = jnp.stack([bp["bn"]["beta"] - bp["bn"]["mean"] *
                         (bp["bn"]["gamma"] / jnp.sqrt(bp["bn"]["var"] + bn_eps))
                         for bp in blocks]).astype(jnp.float32)[:, :, None]   # (nb,C,1)
    gamma = jnp.stack([bp["gamma"].reshape(()) for bp in blocks]).astype(jnp.float32)
    wc = params["conv_w"].reshape(O, C).astype(jnp.float32)                   # (O, C)
    bc = params["conv_b"].reshape(O, 1).astype(jnp.float32)                   # (O, 1)

    # Channel-major: NCHW -> (B, C, L) is a FREE reshape (no HBM transpose).
    x_bcl = x_nchw.reshape(B, C, L).astype(jnp.float32)

    # Batch tile per grid step: amortizes the ~0.35us/step overhead while
    # keeping >= 2 grid steps so both v7x TensorCores get work.
    bt = 1
    for cand in (8, 4, 2):
        if B % cand == 0 and B // cand >= 2:
            bt = cand
            break

    kernel = functools.partial(_global_branch_kernel, C=C, n_blocks=n_blocks,
                               bt=bt, eps=eps, mxu_dtype=mxu_dtype)

    gm, out = pl.pallas_call(
        kernel,
        out_shape=(jax.ShapeDtypeStruct((B, O, L), jnp.float32),
                   jax.ShapeDtypeStruct((B, C, L), jnp.float32)),
        grid=(B // bt,),
        in_specs=[
            pl.BlockSpec((bt, C, L), lambda n: (n, 0, 0)),
            pl.BlockSpec((n_blocks, C, L), lambda n: (0, 0, 0)),
            pl.BlockSpec((n_blocks, 5 * C, C), lambda n: (0, 0, 0)),
            pl.BlockSpec((n_blocks, 5 * C, 1), lambda n: (0, 0, 0)),
            pl.BlockSpec((n_blocks, C, 1), lambda n: (0, 0, 0)),
            pl.BlockSpec((n_blocks, C, 1), lambda n: (0, 0, 0)),
            pl.BlockSpec((O, C), lambda n: (0, 0)),
            pl.BlockSpec((O, 1), lambda n: (0, 0)),
            pl.BlockSpec(memory_space=pltpu.MemorySpace.SMEM),
        ],
        out_specs=(
            pl.BlockSpec((bt, O, L), lambda n: (n, 0, 0)),
            pl.BlockSpec((bt, C, L), lambda n: (n, 0, 0)),
        ),
        compiler_params=pltpu.CompilerParams(dimension_semantics=("parallel",)),
    )(x_bcl, pe, w_cat, b_cat, bn_scale, bn_bias, wc, bc, gamma)

    # Channel-major outputs reshape straight back to NCHW — no transposes.
    global_map = gm.reshape(B, O, H, W)
    out_nchw = out.reshape(B, C, H, W)
    return global_map, out_nchw


def init_global_branch_params(key, dim, L=256, block_num=2, n_out=6):
    n_keys = block_num * 16 + 2
    keys = jax.random.split(key, n_keys)
    kit = iter(keys)

    def linear_init(cout, cin):
        bound = float(1.0 / (cin ** 0.5))
        w = jax.random.uniform(next(kit), (cout, cin), jnp.float32, -bound, bound)
        b = jax.random.uniform(next(kit), (cout,), jnp.float32, -bound, bound)
        return w, b

    blocks = []
    for _ in range(block_num):
        bp = {"pos_emb": jax.random.normal(next(kit), (L, dim), jnp.float32)}
        for name in ("q", "k", "v", "q1", "k1"):
            w, b = linear_init(dim, dim)
            bp["w" + name], bp["b" + name] = w, b
        # torch initializes gamma = zeros(1); use a non-zero value so the
        # attention path is actually exercised by the numerical check.
        bp["gamma"] = 0.1 * jax.random.normal(next(kit), (1,), jnp.float32)
        bp["bn"] = dict(
            gamma=1.0 + 0.1 * jax.random.normal(next(kit), (dim,), jnp.float32),
            beta=0.1 * jax.random.normal(next(kit), (dim,), jnp.float32),
            mean=0.05 * jax.random.normal(next(kit), (dim,), jnp.float32),
            var=jnp.abs(1.0 + 0.1 * jax.random.normal(next(kit), (dim,), jnp.float32)),
        )
        blocks.append(bp)

    conv_w, conv_b = linear_init(n_out, dim)   # 1x1 conv == per-pixel linear
    return dict(blocks=blocks, conv_w=conv_w, conv_b=conv_b)


def ref_global_branch(x_nchw, params, eps=1e-6, bn_eps=1e-5):
    """Plain-JAX mirror of the PyTorch forward (eval-mode BN)."""
    HI = jax.lax.Precision.HIGHEST
    B, C, H, W = x_nchw.shape
    shortcut = x_nchw
    x = x_nchw
    for bp in params["blocks"]:
        xb = jnp.transpose(x, (0, 2, 3, 1)).reshape(B, H * W, C)
        xb = xb + bp["pos_emb"][None]

        def lin(w, b):
            return jnp.einsum("blc,oc->blo", xb, w, precision=HI) + b

        q = jnp.maximum(lin(bp["wq"], bp["bq"]), 0.0)
        k = jnp.maximum(lin(bp["wk"], bp["bk"]), 0.0)
        v = lin(bp["wv"], bp["bv"])
        q1 = lin(bp["wq1"], bp["bq1"])
        k1 = lin(bp["wk1"], bp["bk1"])

        kt = jnp.swapaxes(k, -2, -1)                                   # (B, C, L)
        kv = jnp.einsum("bml,blc->bmc", kt, v, precision=HI)           # (B, C, C)
        z = 1.0 / jnp.einsum("blc,bc->bl", q, jnp.sum(kt, axis=-1) + eps,
                             precision=HI)
        kv_diag = jnp.diagonal(kv, axis1=-2, axis2=-1)                 # = 'bcc' diag
        result = q * kv_diag[:, None, :] * z[:, :, None]
        mid = jax.nn.softmax(jnp.einsum("blc,bld->bcd", q1, k1, precision=HI),
                             axis=-1)
        result = jnp.einsum("blc,bcd->bld", result, mid, precision=HI)
        xb = xb + bp["gamma"] * result

        xc = jnp.transpose(xb, (0, 2, 1)).reshape(B, C, H, W)
        bn = bp["bn"]
        scale = bn["gamma"] / jnp.sqrt(bn["var"] + bn_eps)
        xc = (xc - bn["mean"][None, :, None, None]) * scale[None, :, None, None] \
            + bn["beta"][None, :, None, None]
        x = jnp.maximum(xc, 0.0)

    gm = jnp.einsum("bchw,oc->bohw", x, params["conv_w"], precision=HI) \
        + params["conv_b"][None, :, None, None]
    return gm, x + shortcut


if __name__ == "__main__":
    key = jax.random.PRNGKey(0)
    kx, kp = jax.random.split(key)

    # Global_attention_Module hard-codes L=256, so H*W must be 256.
    B, C, H, W = 2, 32, 16, 16
    x = jax.random.normal(kx, (B, C, H, W), jnp.float32)
    params = init_global_branch_params(kp, dim=C, L=H * W, block_num=2)

    global_map, out = global_branch_forward(x, params)
    global_map, out = jax.block_until_ready((global_map, out))

    assert global_map.shape == (B, 6, H, W), global_map.shape
    assert out.shape == (B, C, H, W), out.shape

    gm_r, out_r = ref_global_branch(x, params)
    assert bool(jnp.allclose(global_map, gm_r, atol=1e-4, rtol=1e-4)), \
        float(jnp.max(jnp.abs(global_map - gm_r)))
    assert bool(jnp.allclose(out, out_r, atol=1e-4, rtol=1e-4)), \
        float(jnp.max(jnp.abs(out - out_r)))

    print("KERNEL_OK")
</pallas_src>

<mosaic_0001>
module attributes {stable_mosaic.version = 11 : i64} {
  func.func @_global_branch_kernel(%arg0: i32, %arg1: memref<1x32x256xf32, #tpu.memory_space<vmem>>, %arg2: memref<2x32x256xf32, #tpu.memory_space<vmem>>, %arg3: memref<2x160x32xf32, #tpu.memory_space<vmem>>, %arg4: memref<2x160x1xf32, #tpu.memory_space<vmem>>, %arg5: memref<2x32x1xf32, #tpu.memory_space<vmem>>, %arg6: memref<2x32x1xf32, #tpu.memory_space<vmem>>, %arg7: memref<6x32xf32, #tpu.memory_space<vmem>>, %arg8: memref<6x1xf32, #tpu.memory_space<vmem>>, %arg9: memref<2xf32, #tpu.memory_space<smem>>, %arg10: memref<1x6x256xf32, #tpu.memory_space<vmem>>, %arg11: memref<1x32x256xf32, #tpu.memory_space<vmem>>) attributes {dimension_semantics = [#tpu.dimension_semantics<parallel>], iteration_bounds = array<i64: 2>, scalar_prefetch = 0 : i64, scratch_operands = 0 : i64, tpu.core_type = #tpu.core_type<tc>, window_params = [{transform_indices = @transform_0, window_bounds = array<i64: 1, 32, 256>}, {pipeline_mode = #tpu.pipeline_mode<synchronous>, transform_indices = @transform_1, window_bounds = array<i64: 2, 32, 256>}, {pipeline_mode = #tpu.pipeline_mode<synchronous>, transform_indices = @transform_2, window_bounds = array<i64: 2, 160, 32>}, {pipeline_mode = #tpu.pipeline_mode<synchronous>, transform_indices = @transform_3, window_bounds = array<i64: 2, 160, 1>}, {pipeline_mode = #tpu.pipeline_mode<synchronous>, transform_indices = @transform_4, window_bounds = array<i64: 2, 32, 1>}, {pipeline_mode = #tpu.pipeline_mode<synchronous>, transform_indices = @transform_5, window_bounds = array<i64: 2, 32, 1>}, {pipeline_mode = #tpu.pipeline_mode<synchronous>, transform_indices = @transform_6, window_bounds = array<i64: 6, 32>}, {pipeline_mode = #tpu.pipeline_mode<synchronous>, transform_indices = @transform_7, window_bounds = array<i64: 6, 1>}, {transform_indices = @transform_8, window_bounds = array<i64: 2>}, {transform_indices = @transform_9, window_bounds = array<i64: 1, 6, 256>}, {transform_indices = @transform_10, window_bounds = array<i64: 1, 32, 256>}]} {
    %c0 = arith.constant 0 : index
    %c0_0 = arith.constant 0 : index
    %c0_1 = arith.constant 0 : index
    %0 = vector.load %arg1[%c0, %c0_0, %c0_1] : memref<1x32x256xf32, #tpu.memory_space<vmem>>, vector<1x32x256xf32>
    %1 = vector.shape_cast %0 : vector<1x32x256xf32> to vector<32x256xf32>
    %c0_2 = arith.constant 0 : index
    %c0_3 = arith.constant 0 : index
    %c0_4 = arith.constant 0 : index
    %2 = vector.load %arg2[%c0_2, %c0_3, %c0_4] : memref<2x32x256xf32, #tpu.memory_space<vmem>>, vector<1x32x256xf32>
    %3 = vector.shape_cast %2 : vector<1x32x256xf32> to vector<32x256xf32>
    %4 = arith.addf %1, %3 : vector<32x256xf32>
    %c0_5 = arith.constant 0 : index
    %c0_6 = arith.constant 0 : index
    %c0_7 = arith.constant 0 : index
    %5 = vector.load %arg3[%c0_5, %c0_6, %c0_7] : memref<2x160x32xf32, #tpu.memory_space<vmem>>, vector<1x160x32xf32>
    %6 = vector.shape_cast %5 : vector<1x160x32xf32> to vector<160x32xf32>
    %cst = arith.constant dense<0.000000e+00> : vector<160x256xf32>
    %7 = tpu.matmul %6, %4, %cst {dimension_numbers = #tpu.dot_dimension_numbers<[1], [0], [0], [1], [0, 0, 1, 1], [], []>} : vector<160x32xf32>, vector<32x256xf32>, vector<160x256xf32> -> vector<160x256xf32>
    %c0_8 = arith.constant 0 : index
    %c0_9 = arith.constant 0 : index
    %c0_10 = arith.constant 0 : index
    %8 = vector.load %arg4[%c0_8, %c0_9, %c0_10] : memref<2x160x1xf32, #tpu.memory_space<vmem>>, vector<1x160x1xf32>
    %9 = vector.shape_cast %8 : vector<1x160x1xf32> to vector<160x1xf32>
    %10 = vector.broadcast %9 : vector<160x1xf32> to vector<160x256xf32>
    %11 = arith.addf %7, %10 : vector<160x256xf32>
    %12 = vector.extract_strided_slice %11 {offsets = [0, 0], sizes = [32, 256], strides = [1, 1]} : vector<160x256xf32> to vector<32x256xf32>
    %cst_11 = arith.constant 0.000000e+00 : f32
    %13 = vector.broadcast %cst_11 : f32 to vector<32x256xf32>
    %14 = arith.maximumf %12, %13 : vector<32x256xf32>
    %15 = vector.extract_strided_slice %11 {offsets = [32, 0], sizes = [32, 256], strides = [1, 1]} : vector<160x256xf32> to vector<32x256xf32>
    %cst_12 = arith.constant 0.000000e+00 : f32
    %16 = vector.broadcast %cst_12 : f32 to vector<32x256xf32>
    %17 = arith.maximumf %15, %16 : vector<32x256xf32>
    %18 = vector.extract_strided_slice %11 {offsets = [64, 0], sizes = [32, 256], strides = [1, 1]} : vector<160x256xf32> to vector<32x256xf32>
    %19 = vector.extract_strided_slice %11 {offsets = [96, 0], sizes = [32, 256], strides = [1, 1]} : vector<160x256xf32> to vector<32x256xf32>
    %20 = vector.extract_strided_slice %11 {offsets = [128, 0], sizes = [32, 256], strides = [1, 1]} : vector<160x256xf32> to vector<32x256xf32>
    %21 = arith.mulf %17, %18 : vector<32x256xf32>
    %cst_13 = arith.constant dense<0.000000e+00> : vector<32xf32>
    %22 = vector.multi_reduction <add>, %21, %cst_13 [1] : vector<32x256xf32> to vector<32xf32>
    %23 = vector.shape_cast %22 : vector<32xf32> to vector<32x1xf32>
    %cst_14 = arith.constant dense<0.000000e+00> : vector<32xf32>
    %24 = vector.multi_reduction <add>, %17, %cst_14 [1] : vector<32x256xf32> to vector<32xf32>
    %25 = vector.shape_cast %24 : vector<32xf32> to vector<32x1xf32>
    %cst_15 = arith.constant 9.99999997E-7 : f32
    %26 = vector.broadcast %cst_15 : f32 to vector<32x1xf32>
    %27 = arith.addf %25, %26 : vector<32x1xf32>
    %28 = vector.broadcast %27 : vector<32x1xf32> to vector<32x256xf32>
    %29 = arith.mulf %14, %28 : vector<32x256xf32>
    %cst_16 = arith.constant dense<0.000000e+00> : vector<256xf32>
    %30 = vector.multi_reduction <add>, %29, %cst_16 [0] : vector<32x256xf32> to vector<256xf32>
    %31 = vector.shape_cast %30 : vector<256xf32> to vector<1x256xf32>
    %32 = vector.broadcast %23 : vector<32x1xf32> to vector<32x256xf32>
    %33 = arith.mulf %14, %32 : vector<32x256xf32>
    %34 = tpu.reciprocal %31 {approx = true} : vector<1x256xf32> -> vector<1x256xf32>
    %35 = vector.broadcast %34 : vector<1x256xf32> to vector<32x256xf32>
    %36 = arith.mulf %33, %35 : vector<32x256xf32>
    %cst_17 = arith.constant dense<0.000000e+00> : vector<32x32xf32>
    %37 = tpu.matmul %19, %20, %cst_17 {dimension_numbers = #tpu.dot_dimension_numbers<[1], [1], [0], [0], [0, 0, 1, 0], [], []>} : vector<32x256xf32>, vector<32x256xf32>, vector<32x32xf32> -> vector<32x32xf32>
    %cst_18 = arith.constant dense<0xFF800000> : vector<32xf32>
    %38 = vector.multi_reduction <maximumf>, %37, %cst_18 [1] : vector<32x32xf32> to vector<32xf32>
    %39 = vector.shape_cast %38 : vector<32xf32> to vector<32x1xf32>
    %40 = vector.broadcast %39 : vector<32x1xf32> to vector<32x32xf32>
    %41 = arith.subf %37, %40 : vector<32x32xf32>
    %42 = math.exp %41 : vector<32x32xf32>
    %cst_19 = arith.constant dense<0.000000e+00> : vector<32xf32>
    %43 = vector.multi_reduction <add>, %42, %cst_19 [1] : vector<32x32xf32> to vector<32xf32>
    %44 = vector.shape_cast %43 : vector<32xf32> to vector<32x1xf32>
    %45 = tpu.reciprocal %44 {approx = true} : vector<32x1xf32> -> vector<32x1xf32>
    %46 = vector.broadcast %45 : vector<32x1xf32> to vector<32x32xf32>
    %47 = arith.mulf %42, %46 : vector<32x32xf32>
    %cst_20 = arith.constant dense<0.000000e+00> : vector<32x256xf32>
    %48 = tpu.matmul %47, %36, %cst_20 {dimension_numbers = #tpu.dot_dimension_numbers<[0], [0], [1], [1], [0, 1, 1, 1], [], []>} : vector<32x32xf32>, vector<32x256xf32>, vector<32x256xf32> -> vector<32x256xf32>
    %c0_21 = arith.constant 0 : index
    %49 = memref.load %arg9[%c0_21] : memref<2xf32, #tpu.memory_space<smem>>
    %50 = vector.broadcast %49 : f32 to vector<32x256xf32>
    %51 = arith.mulf %50, %48 : vector<32x256xf32>
    %52 = arith.addf %4, %51 : vector<32x256xf32>
    %c0_22 = arith.constant 0 : index
    %c0_23 = arith.constant 0 : index
    %c0_24 = arith.constant 0 : index
    %53 = vector.load %arg5[%c0_22, %c0_23, %c0_24] : memref<2x32x1xf32, #tpu.memory_space<vmem>>, vector<1x32x1xf32>
    %54 = vector.shape_cast %53 : vector<1x32x1xf32> to vector<32x1xf32>
    %55 = vector.broadcast %54 : vector<32x1xf32> to vector<32x256xf32>
    %56 = arith.mulf %52, %55 : vector<32x256xf32>
    %c0_25 = arith.constant 0 : index
    %c0_26 = arith.constant 0 : index
    %c0_27 = arith.constant 0 : index
    %57 = vector.load %arg6[%c0_25, %c0_26, %c0_27] : memref<2x32x1xf32, #tpu.memory_space<vmem>>, vector<1x32x1xf32>
    %58 = vector.shape_cast %57 : vector<1x32x1xf32> to vector<32x1xf32>
    %59 = vector.broadcast %58 : vector<32x1xf32> to vector<32x256xf32>
    %60 = arith.addf %56, %59 : vector<32x256xf32>
    %cst_28 = arith.constant 0.000000e+00 : f32
    %61 = vector.broadcast %cst_28 : f32 to vector<32x256xf32>
    %62 = arith.maximumf %60, %61 : vector<32x256xf32>
    %c1 = arith.constant 1 : index
    %c0_29 = arith.constant 0 : index
    %c0_30 = arith.constant 0 : index
    %63 = vector.load %arg2[%c1, %c0_29, %c0_30] : memref<2x32x256xf32, #tpu.memory_space<vmem>>, vector<1x32x256xf32>
    %64 = vector.shape_cast %63 : vector<1x32x256xf32> to vector<32x256xf32>
    %65 = arith.addf %62, %64 : vector<32x256xf32>
    %c1_31 = arith.constant 1 : index
    %c0_32 = arith.constant 0 : index
    %c0_33 = arith.constant 0 : index
    %66 = vector.load %arg3[%c1_31, %c0_32, %c0_33] : memref<2x160x32xf32, #tpu.memory_space<vmem>>, vector<1x160x32xf32>
    %67 = vector.shape_cast %66 : vector<1x160x32xf32> to vector<160x32xf32>
    %cst_34 = arith.constant dense<0.000000e+00> : vector<160x256xf32>
    %68 = tpu.matmul %67, %65, %cst_34 {dimension_numbers = #tpu.dot_dimension_numbers<[1], [0], [0], [1], [0, 0, 1, 1], [], []>} : vector<160x32xf32>, vector<32x256xf32>, vector<160x256xf32> -> vector<160x256xf32>
    %c1_35 = arith.constant 1 : index
    %c0_36 = arith.constant 0 : index
    %c0_37 = arith.constant 0 : index
    %69 = vector.load %arg4[%c1_35, %c0_36, %c0_37] : memref<2x160x1xf32, #tpu.memory_space<vmem>>, vector<1x160x1xf32>
    %70 = vector.shape_cast %69 : vector<1x160x1xf32> to vector<160x1xf32>
    %71 = vector.broadcast %70 : vector<160x1xf32> to vector<160x256xf32>
    %72 = arith.addf %68, %71 : vector<160x256xf32>
    %73 = vector.extract_strided_slice %72 {offsets = [0, 0], sizes = [32, 256], strides = [1, 1]} : vector<160x256xf32> to vector<32x256xf32>
    %cst_38 = arith.constant 0.000000e+00 : f32
    %74 = vector.broadcast %cst_38 : f32 to vector<32x256xf32>
    %75 = arith.maximumf %73, %74 : vector<32x256xf32>
    %76 = vector.extract_strided_slice %72 {offsets = [32, 0], sizes = [32, 256], strides = [1, 1]} : vector<160x256xf32> to vector<32x256xf32>
    %cst_39 = arith.constant 0.000000e+00 : f32
    %77 = vector.broadcast %cst_39 : f32 to vector<32x256xf32>
    %78 = arith.maximumf %76, %77 : vector<32x256xf32>
    %79 = vector.extract_strided_slice %72 {offsets = [64, 0], sizes = [32, 256], strides = [1, 1]} : vector<160x256xf32> to vector<32x256xf32>
    %80 = vector.extract_strided_slice %72 {offsets = [96, 0], sizes = [32, 256], strides = [1, 1]} : vector<160x256xf32> to vector<32x256xf32>
    %81 = vector.extract_strided_slice %72 {offsets = [128, 0], sizes = [32, 256], strides = [1, 1]} : vector<160x256xf32> to vector<32x256xf32>
    %82 = arith.mulf %78, %79 : vector<32x256xf32>
    %cst_40 = arith.constant dense<0.000000e+00> : vector<32xf32>
    %83 = vector.multi_reduction <add>, %82, %cst_40 [1] : vector<32x256xf32> to vector<32xf32>
    %84 = vector.shape_cast %83 : vector<32xf32> to vector<32x1xf32>
    %cst_41 = arith.constant dense<0.000000e+00> : vector<32xf32>
    %85 = vector.multi_reduction <add>, %78, %cst_41 [1] : vector<32x256xf32> to vector<32xf32>
    %86 = vector.shape_cast %85 : vector<32xf32> to vector<32x1xf32>
    %cst_42 = arith.constant 9.99999997E-7 : f32
    %87 = vector.broadcast %cst_42 : f32 to vector<32x1xf32>
    %88 = arith.addf %86, %87 : vector<32x1xf32>
    %89 = vector.broadcast %88 : vector<32x1xf32> to vector<32x256xf32>
    %90 = arith.mulf %75, %89 : vector<32x256xf32>
    %cst_43 = arith.constant dense<0.000000e+00> : vector<256xf32>
    %91 = vector.multi_reduction <add>, %90, %cst_43 [0] : vector<32x256xf32> to vector<256xf32>
    %92 = vector.shape_cast %91 : vector<256xf32> to vector<1x256xf32>
    %93 = vector.broadcast %84 : vector<32x1xf32> to vector<32x256xf32>
    %94 = arith.mulf %75, %93 : vector<32x256xf32>
    %95 = tpu.reciprocal %92 {approx = true} : vector<1x256xf32> -> vector<1x256xf32>
    %96 = vector.broadcast %95 : vector<1x256xf32> to vector<32x256xf32>
    %97 = arith.mulf %94, %96 : vector<32x256xf32>
    %cst_44 = arith.constant dense<0.000000e+00> : vector<32x32xf32>
    %98 = tpu.matmul %80, %81, %cst_44 {dimension_numbers = #tpu.dot_dimension_numbers<[1], [1], [0], [0], [0, 0, 1, 0], [], []>} : vector<32x256xf32>, vector<32x256xf32>, vector<32x32xf32> -> vector<32x32xf32>
    %cst_45 = arith.constant dense<0xFF800000> : vector<32xf32>
    %99 = vector.multi_reduction <maximumf>, %98, %cst_45 [1] : vector<32x32xf32> to vector<32xf32>
    %100 = vector.shape_cast %99 : vector<32xf32> to vector<32x1xf32>
    %101 = vector.broadcast %100 : vector<32x1xf32> to vector<32x32xf32>
    %102 = arith.subf %98, %101 : vector<32x32xf32>
    %103 = math.exp %102 : vector<32x32xf32>
    %cst_46 = arith.constant dense<0.000000e+00> : vector<32xf32>
    %104 = vector.multi_reduction <add>, %103, %cst_46 [1] : vector<32x32xf32> to vector<32xf32>
    %105 = vector.shape_cast %104 : vector<32xf32> to vector<32x1xf32>
    %106 = tpu.reciprocal %105 {approx = true} : vector<32x1xf32> -> vector<32x1xf32>
    %107 = vector.broadcast %106 : vector<32x1xf32> to vector<32x32xf32>
    %108 = arith.mulf %103, %107 : vector<32x32xf32>
    %cst_47 = arith.constant dense<0.000000e+00> : vector<32x256xf32>
    %109 = tpu.matmul %108, %97, %cst_47 {dimension_numbers = #tpu.dot_dimension_numbers<[0], [0], [1], [1], [0, 1, 1, 1], [], []>} : vector<32x32xf32>, vector<32x256xf32>, vector<32x256xf32> -> vector<32x256xf32>
    %c1_48 = arith.constant 1 : index
    %110 = memref.load %arg9[%c1_48] : memref<2xf32, #tpu.memory_space<smem>>
    %111 = vector.broadcast %110 : f32 to vector<32x256xf32>
    %112 = arith.mulf %111, %109 : vector<32x256xf32>
    %113 = arith.addf %65, %112 : vector<32x256xf32>
    %c1_49 = arith.constant 1 : index
    %c0_50 = arith.constant 0 : index
    %c0_51 = arith.constant 0 : index
    %114 = vector.load %arg5[%c1_49, %c0_50, %c0_51] : memref<2x32x1xf32, #tpu.memory_space<vmem>>, vector<1x32x1xf32>
    %115 = vector.shape_cast %114 : vector<1x32x1xf32> to vector<32x1xf32>
    %116 = vector.broadcast %115 : vector<32x1xf32> to vector<32x256xf32>
    %117 = arith.mulf %113, %116 : vector<32x256xf32>
    %c1_52 = arith.constant 1 : index
    %c0_53 = arith.constant 0 : index
    %c0_54 = arith.constant 0 : index
    %118 = vector.load %arg6[%c1_52, %c0_53, %c0_54] : memref<2x32x1xf32, #tpu.memory_space<vmem>>, vector<1x32x1xf32>
    %119 = vector.shape_cast %118 : vector<1x32x1xf32> to vector<32x1xf32>
    %120 = vector.broadcast %119 : vector<32x1xf32> to vector<32x256xf32>
    %121 = arith.addf %117, %120 : vector<32x256xf32>
    %cst_55 = arith.constant 0.000000e+00 : f32
    %122 = vector.broadcast %cst_55 : f32 to vector<32x256xf32>
    %123 = arith.maximumf %121, %122 : vector<32x256xf32>
    %c0_56 = arith.constant 0 : index
    %c0_57 = arith.constant 0 : index
    %124 = vector.load %arg7[%c0_56, %c0_57] : memref<6x32xf32, #tpu.memory_space<vmem>>, vector<6x32xf32>
    %cst_58 = arith.constant dense<0.000000e+00> : vector<6x256xf32>
    %125 = tpu.matmul %124, %123, %cst_58 {dimension_numbers = #tpu.dot_dimension_numbers<[1], [0], [0], [1], [0, 0, 1, 1], [], []>} : vector<6x32xf32>, vector<32x256xf32>, vector<6x256xf32> -> vector<6x256xf32>
    %c0_59 = arith.constant 0 : index
    %c0_60 = arith.constant 0 : index
    %126 = vector.load %arg8[%c0_59, %c0_60] : memref<6x1xf32, #tpu.memory_space<vmem>>, vector<6x1xf32>
    %127 = vector.broadcast %126 : vector<6x1xf32> to vector<6x256xf32>
    %128 = arith.addf %125, %127 : vector<6x256xf32>
    %c0_61 = arith.constant 0 : index
    %c0_62 = arith.constant 0 : index
    %c0_63 = arith.constant 0 : index
    %129 = vector.load %arg10[%c0_61, %c0_62, %c0_63] : memref<1x6x256xf32, #tpu.memory_space<vmem>>, vector<1x6x256xf32>
    %130 = vector.shape_cast %129 : vector<1x6x256xf32> to vector<6x256xf32>
    %131 = vector.shape_cast %128 : vector<6x256xf32> to vector<1x6x256xf32>
    tpu.vector_store %arg10[%c0_61, %c0_62, %c0_63], %131 {strides = array<i32>} : memref<1x6x256xf32, #tpu.memory_space<vmem>>, vector<1x6x256xf32>,
    %132 = arith.addf %123, %1 : vector<32x256xf32>
    %c0_64 = arith.constant 0 : index
    %c0_65 = arith.constant 0 : index
    %c0_66 = arith.constant 0 : index
    %133 = vector.load %arg11[%c0_64, %c0_65, %c0_66] : memref<1x32x256xf32, #tpu.memory_space<vmem>>, vector<1x32x256xf32>
    %134 = vector.shape_cast %133 : vector<1x32x256xf32> to vector<32x256xf32>
    %135 = vector.shape_cast %132 : vector<32x256xf32> to vector<1x32x256xf32>
    tpu.vector_store %arg11[%c0_64, %c0_65, %c0_66], %135 {strides = array<i32>} : memref<1x32x256xf32, #tpu.memory_space<vmem>>, vector<1x32x256xf32>,
    return
  }
  func.func @transform_0(%arg0: i32) -> (i32, i32, i32) {
    %c0_i32 = arith.constant 0 : i32
    %c0_i32_0 = arith.constant 0 : i32
    %c0_i32_1 = arith.constant 0 : i32
    return %arg0, %c0_i32, %c0_i32_0 : i32, i32, i32
  }
  func.func @transform_1(%arg0: i32) -> (i32, i32, i32) {
    %c0_i32 = arith.constant 0 : i32
    %c0_i32_0 = arith.constant 0 : i32
    %c0_i32_1 = arith.constant 0 : i32
    %c0_i32_2 = arith.constant 0 : i32
    return %c0_i32, %c0_i32_0, %c0_i32_1 : i32, i32, i32
  }
  func.func @transform_2(%arg0: i32) -> (i32, i32, i32) {
    %c0_i32 = arith.constant 0 : i32
    %c0_i32_0 = arith.constant 0 : i32
    %c0_i32_1 = arith.constant 0 : i32
    %c0_i32_2 = arith.constant 0 : i32
    return %c0_i32, %c0_i32_0, %c0_i32_1 : i32, i32, i32
  }
  func.func @transform_3(%arg0: i32) -> (i32, i32, i32) {
    %c0_i32 = arith.constant 0 : i32
    %c0_i32_0 = arith.constant 0 : i32
    %c0_i32_1 = arith.constant 0 : i32
    %c0_i32_2 = arith.constant 0 : i32
    return %c0_i32, %c0_i32_0, %c0_i32_1 : i32, i32, i32
  }
  func.func @transform_4(%arg0: i32) -> (i32, i32, i32) {
    %c0_i32 = arith.constant 0 : i32
    %c0_i32_0 = arith.constant 0 : i32
    %c0_i32_1 = arith.constant 0 : i32
    %c0_i32_2 = arith.constant 0 : i32
    return %c0_i32, %c0_i32_0, %c0_i32_1 : i32, i32, i32
  }
  func.func @transform_5(%arg0: i32) -> (i32, i32, i32) {
    %c0_i32 = arith.constant 0 : i32
    %c0_i32_0 = arith.constant 0 : i32
    %c0_i32_1 = arith.constant 0 : i32
    %c0_i32_2 = arith.constant 0 : i32
    return %c0_i32, %c0_i32_0, %c0_i32_1 : i32, i32, i32
  }
  func.func @transform_6(%arg0: i32) -> (i32, i32) {
    %c0_i32 = arith.constant 0 : i32
    %c0_i32_0 = arith.constant 0 : i32
    %c0_i32_1 = arith.constant 0 : i32
    return %c0_i32, %c0_i32_0 : i32, i32
  }
  func.func @transform_7(%arg0: i32) -> (i32, i32) {
    %c0_i32 = arith.constant 0 : i32
    %c0_i32_0 = arith.constant 0 : i32
    %c0_i32_1 = arith.constant 0 : i32
    return %c0_i32, %c0_i32_0 : i32, i32
  }
  func.func @transform_8(%arg0: i32) -> i32 {
    %c0_i32 = arith.constant 0 : i32
    %c0_i32_0 = arith.constant 0 : i32
    return %c0_i32 : i32
  }
  func.func @transform_9(%arg0: i32) -> (i32, i32, i32) {
    %c0_i32 = arith.constant 0 : i32
    %c0_i32_0 = arith.constant 0 : i32
    %c0_i32_1 = arith.constant 0 : i32
    return %arg0, %c0_i32, %c0_i32_0 : i32, i32, i32
  }
  func.func @transform_10(%arg0: i32) -> (i32, i32, i32) {
    %c0_i32 = arith.constant 0 : i32
    %c0_i32_0 = arith.constant 0 : i32
    %c0_i32_1 = arith.constant 0 : i32
    return %arg0, %c0_i32, %c0_i32_0 : i32, i32, i32
  }
}

</mosaic_0001>

<llo_original>
// kernel: tpu_custom_call.1
$region0: #{tpu_custom_call.1}
  #allocation0 [shape = 'u32[]', space=smem, size = 0x4, offset = 0x4, fixed_abs, tag = 'smem constant byte address 0x4 - core index']
  #allocation1 [shape = 'u32[144,128]{1,0:T(1,128)}', space=vmem, size = 0x12000, scoped, tag = 'internal scratch']
  %s0 = inlined_call_operand.vmem [shape: f32[2,32,256], index: 0, kind: input, shape index: {}]
  %s1 = inlined_call_operand.vmem [shape: f32[2,32,256], index: 1, kind: input, shape index: {}]
  %s2 = inlined_call_operand.vmem [shape: f32[2,160,32], index: 2, kind: input, shape index: {}]
  %s3 = inlined_call_operand.vmem [shape: f32[2,160,1], index: 3, kind: input, shape index: {}]
  %s4 = inlined_call_operand.vmem [shape: f32[2,32,1], index: 4, kind: input, shape index: {}]
  %s5 = inlined_call_operand.vmem [shape: f32[2,32,1], index: 5, kind: input, shape index: {}]
  %s6 = inlined_call_operand.vmem [shape: f32[6,32], index: 6, kind: input, shape index: {}]
  %s7 = inlined_call_operand.vmem [shape: f32[6,1], index: 7, kind: input, shape index: {}]
  %s8 = inlined_call_operand.vmem [shape: f32[2], index: 8, kind: input, shape index: {}]
  %s9 = inlined_call_operand.vmem [shape: f32[2,6,256], index: 9, kind: output, shape index: {0}]
  %s10 = inlined_call_operand.hbm [shape: f32[2,32,256], index: 10, kind: output, shape index: {1}]
  %11 = xla_tuple %s9, %s10
  %s12 = sld [smem:[#allocation0]]
  $region81: #{tpu_custom_call.1} parent=0
    _
  %s14 = ssub.s32 1, %s12
  %s15 = scalar_select 0, %s14, %s12
  $region1: #{tpu_custom_call.1} parent=0
    #allocation2 [shape = 'u8[512]{0}', space=smem, size = 0x200, scoped, tag = 'input window, operand 8, single buffered']
    #allocation3 [shape = 's32[2]{0}', space=sflag, size = 0x8, scoped, tag = 'scoped memory for tpu_custom_call.1']
    #allocation4 [shape = 's32[2]{0}', space=sflag, size = 0x8, scoped, tag = 'scoped memory for tpu_custom_call.1']
    #allocation5 [shape = 'u8[65536]{0}', space=vmem, size = 0x10000, scoped, tag = 'output window, operand 1']
    %16 = vsyncpa [#allocation4], 0
    %17 = vsyncpa [#allocation3], 0
    %s18 = scalar_lea.sflag [#allocation3], 1
    %19 = vsyncpa %s18, 0
    loop: start=0, step=1, limit=4
    $region2: #{tpu_custom_call.1} parent=1 // loop_pre_header
      _
    $region3: #{tpu_custom_call.1} parent=1 // loop_header
      %s21 = sphi 0, %s25
      %p22 = scmp.ge.s32.totalorder %s21, 4
      %s31 = sphi 0, %s33
      %s34 = sphi 0, %s31
      %s35 = sphi 0, %s34
      %s51 = sphi 0, %s35
      %s55 = sphi 0, %s55
      %s57 = sphi 0, %s55
      %s58 = sphi 0, %s57
      %s72 = sphi 0, %s58
      %s76 = sphi 0, %s76
      %s78 = sphi 0, %s76
      %s79 = sphi 0, %s78
      %s93 = sphi 0, %s79
      %s97 = sphi 0, %s97
      %s99 = sphi 0, %s97
      %s100 = sphi 0, %s99
      %s114 = sphi 0, %s100
      %s118 = sphi 0, %s118
      %s120 = sphi 0, %s118
      %s121 = sphi 0, %s120
      %s135 = sphi 0, %s121
      %s139 = sphi 0, %s139
      %s141 = sphi 0, %s139
      %s142 = sphi 0, %s141
      %s156 = sphi 0, %s142
      %s160 = sphi 0, %s160
      %s162 = sphi 0, %s160
      %s163 = sphi 0, %s162
      %s177 = sphi 0, %s163
      %s181 = sphi 0, %s181
      %s183 = sphi 0, %s181
      %s184 = sphi 0, %s183
      %s198 = sphi 0, %s184
      %s202 = sphi 0, %s202
      %s204 = sphi 0, %s202
      %s205 = sphi 0, %s204
      %s219 = sphi 0, %s205
      %s225 = sphi 0, %s227
      %s228 = sphi 0, %s225
      %s229 = sphi 0, %s228
      %s245 = sphi 0, %s229
      %s251 = sphi 0, %s253
      %s254 = sphi 0, %s251
      %s255 = sphi 0, %s254
      %s271 = sphi 0, %s255
    $region4: #{tpu_custom_call.1} parent=1 // loop_header_branch
      %24 = sbr.rel (%p22) target = $region8
    $region5: #{tpu_custom_call.1} parent=1 // loop_body
      %s26 = ssub.s32 %s21, 1
      %s27 = ssub.s32 %s21, 2
      %s28 = sadd.s32 %s21, 1
      %s29 = ssub.s32 %s21, %s28
      %p30 = scmp.eq.s32.totalorder %s29, 0
      %s32 = sadd.s32 %s31, 1
      %s33 = scalar_select %p30, %s31, %s32
      %p36 = pneg %p30
      %p37 = scmp.eq.s32.totalorder %s21, 1
      %p38 = por %p36, %p37
      %p39 = scmp.ne.s32.totalorder %s31, %s34
      %p40 = scmp.eq.s32.totalorder %s21, 0
      %p41 = por %p39, %p40
      %p42 = scmp.ne.s32.totalorder %s31, %s34
      %p43 = scmp.eq.s32.totalorder %s26, 1
      %p44 = por %p42, %p43
      %p45 = scmp.ne.s32.totalorder %s34, %s35
      %p46 = scmp.eq.s32.totalorder %s26, 0
      %p47 = por %p45, %p46
      %p48 = scmp.ne.s32.totalorder %s34, %s35
      %p49 = scmp.eq.s32.totalorder %s27, 1
      %p50 = por %p48, %p49
      %p52 = scmp.ne.s32.totalorder %s35, %s51
      %p53 = scmp.eq.s32.totalorder %s27, 0
      %p54 = por %p52, %p53
      %s56 = sadd.s32 %s55, 1
      %p59 = scmp.eq.s32.totalorder %s21, 1
      %p60 = scmp.ne.s32.totalorder %s55, %s57
      %p61 = scmp.eq.s32.totalorder %s21, 0
      %p62 = por %p60, %p61
      %p63 = scmp.ne.s32.totalorder %s55, %s57
      %p64 = scmp.eq.s32.totalorder %s26, 1
      %p65 = por %p63, %p64
      %p66 = scmp.ne.s32.totalorder %s57, %s58
      %p67 = scmp.eq.s32.totalorder %s26, 0
      %p68 = por %p66, %p67
      %p69 = scmp.ne.s32.totalorder %s57, %s58
      %p70 = scmp.eq.s32.totalorder %s27, 1
      %p71 = por %p69, %p70
      %p73 = scmp.ne.s32.totalorder %s58, %s72
      %p74 = scmp.eq.s32.totalorder %s27, 0
      %p75 = por %p73, %p74
      %s77 = sadd.s32 %s76, 1
      %p80 = scmp.eq.s32.totalorder %s21, 1
      %p81 = scmp.ne.s32.totalorder %s76, %s78
      %p82 = scmp.eq.s32.totalorder %s21, 0
      %p83 = por %p81, %p82
      %p84 = scmp.ne.s32.totalorder %s76, %s78
      %p85 = scmp.eq.s32.totalorder %s26, 1
      %p86 = por %p84, %p85
      %p87 = scmp.ne.s32.totalorder %s78, %s79
      %p88 = scmp.eq.s32.totalorder %s26, 0
      %p89 = por %p87, %p88
      %p90 = scmp.ne.s32.totalorder %s78, %s79
      %p91 = scmp.eq.s32.totalorder %s27, 1
      %p92 = por %p90, %p91
      %p94 = scmp.ne.s32.totalorder %s79, %s93
      %p95 = scmp.eq.s32.totalorder %s27, 0
      %p96 = por %p94, %p95
      %s98 = sadd.s32 %s97, 1
      %p101 = scmp.eq.s32.totalorder %s21, 1
      %p102 = scmp.ne.s32.totalorder %s97, %s99
      %p103 = scmp.eq.s32.totalorder %s21, 0
      %p104 = por %p102, %p103
      %p105 = scmp.ne.s32.totalorder %s97, %s99
      %p106 = scmp.eq.s32.totalorder %s26, 1
      %p107 = por %p105, %p106
      %p108 = scmp.ne.s32.totalorder %s99, %s100
      %p109 = scmp.eq.s32.totalorder %s26, 0
      %p110 = por %p108, %p109
      %p111 = scmp.ne.s32.totalorder %s99, %s100
      %p112 = scmp.eq.s32.totalorder %s27, 1
      %p113 = por %p111, %p112
      %p115 = scmp.ne.s32.totalorder %s100, %s114
      %p116 = scmp.eq.s32.totalorder %s27, 0
      %p117 = por %p115, %p116
      %s119 = sadd.s32 %s118, 1
      %p122 = scmp.eq.s32.totalorder %s21, 1
      %p123 = scmp.ne.s32.totalorder %s118, %s120
      %p124 = scmp.eq.s32.totalorder %s21, 0
      %p125 = por %p123, %p124
      %p126 = scmp.ne.s32.totalorder %s118, %s120
      %p127 = scmp.eq.s32.totalorder %s26, 1
      %p128 = por %p126, %p127
      %p129 = scmp.ne.s32.totalorder %s120, %s121
      %p130 = scmp.eq.s32.totalorder %s26, 0
      %p131 = por %p129, %p130
      %p132 = scmp.ne.s32.totalorder %s120, %s121
      %p133 = scmp.eq.s32.totalorder %s27, 1
      %p134 = por %p132, %p133
      %p136 = scmp.ne.s32.totalorder %s121, %s135
      %p137 = scmp.eq.s32.totalorder %s27, 0
      %p138 = por %p136, %p137
      %s140 = sadd.s32 %s139, 1
      %p143 = scmp.eq.s32.totalorder %s21, 1
      %p144 = scmp.ne.s32.totalorder %s139, %s141
      %p145 = scmp.eq.s32.totalorder %s21, 0
      %p146 = por %p144, %p145
      %p147 = scmp.ne.s32.totalorder %s139, %s141
      %p148 = scmp.eq.s32.totalorder %s26, 1
      %p149 = por %p147, %p148
      %p150 = scmp.ne.s32.totalorder %s141, %s142
      %p151 = scmp.eq.s32.totalorder %s26, 0
      %p152 = por %p150, %p151
      %p153 = scmp.ne.s32.totalorder %s141, %s142
      %p154 = scmp.eq.s32.totalorder %s27, 1
      %p155 = por %p153, %p154
      %p157 = scmp.ne.s32.totalorder %s142, %s156
      %p158 = scmp.eq.s32.totalorder %s27, 0
      %p159 = por %p157, %p158
      %s161 = sadd.s32 %s160, 1
      %p164 = scmp.eq.s32.totalorder %s21, 1
      %p165 = scmp.ne.s32.totalorder %s160, %s162
      %p166 = scmp.eq.s32.totalorder %s21, 0
      %p167 = por %p165, %p166
      %p168 = scmp.ne.s32.totalorder %s160, %s162
      %p169 = scmp.eq.s32.totalorder %s26, 1
      %p170 = por %p168, %p169
      %p171 = scmp.ne.s32.totalorder %s162, %s163
      %p172 = scmp.eq.s32.totalorder %s26, 0
      %p173 = por %p171, %p172
      %p174 = scmp.ne.s32.totalorder %s162, %s163
      %p175 = scmp.eq.s32.totalorder %s27, 1
      %p176 = por %p174, %p175
      %p178 = scmp.ne.s32.totalorder %s163, %s177
      %p179 = scmp.eq.s32.totalorder %s27, 0
      %p180 = por %p178, %p179
      %s182 = sadd.s32 %s181, 1
      %p185 = scmp.eq.s32.totalorder %s21, 1
      %p186 = scmp.ne.s32.totalorder %s181, %s183
      %p187 = scmp.eq.s32.totalorder %s21, 0
      %p188 = por %p186, %p187
      %p189 = scmp.ne.s32.totalorder %s181, %s183
      %p190 = scmp.eq.s32.totalorder %s26, 1
      %p191 = por %p189, %p190
      %p192 = scmp.ne.s32.totalorder %s183, %s184
      %p193 = scmp.eq.s32.totalorder %s26, 0
      %p194 = por %p192, %p193
      %p195 = scmp.ne.s32.totalorder %s183, %s184
      %p196 = scmp.eq.s32.totalorder %s27, 1
      %p197 = por %p195, %p196
      %p199 = scmp.ne.s32.totalorder %s184, %s198
      %p200 = scmp.eq.s32.totalorder %s27, 0
      %p201 = por %p199, %p200
      %s203 = sadd.s32 %s202, 1
      %p206 = scmp.eq.s32.totalorder %s21, 1
      %p207 = scmp.ne.s32.totalorder %s202, %s204
      %p208 = scmp.eq.s32.totalorder %s21, 0
      %p209 = por %p207, %p208
      %p210 = scmp.ne.s32.totalorder %s202, %s204
      %p211 = scmp.eq.s32.totalorder %s26, 1
      %p212 = por %p210, %p211
      %p213 = scmp.ne.s32.totalorder %s204, %s205
      %p214 = scmp.eq.s32.totalorder %s26, 0
      %p215 = por %p213, %p214
      %p216 = scmp.ne.s32.totalorder %s204, %s205
      %p217 = scmp.eq.s32.totalorder %s27, 1
      %p218 = por %p216, %p217
      %p220 = scmp.ne.s32.totalorder %s205, %s219
      %p221 = scmp.eq.s32.totalorder %s27, 0
      %p222 = por %p220, %p221
      %s223 = ssub.s32 %s21, %s28
      %p224 = scmp.eq.s32.totalorder %s223, 0
      %s226 = sadd.s32 %s225, 1
      %s227 = scalar_select %p224, %s225, %s226
      %p230 = pneg %p224
      %p231 = scmp.eq.s32.totalorder %s21, 1
      %p232 = por %p230, %p231
      %p233 = scmp.ne.s32.totalorder %s225, %s228
      %p234 = scmp.eq.s32.totalorder %s21, 0
      %p235 = por %p233, %p234
      %p236 = scmp.ne.s32.totalorder %s225, %s228
      %p237 = scmp.eq.s32.totalorder %s26, 1
      %p238 = por %p236, %p237
      %p239 = scmp.ne.s32.totalorder %s228, %s229
      %p240 = scmp.eq.s32.totalorder %s26, 0
      %p241 = por %p239, %p240
      %p242 = scmp.ne.s32.totalorder %s228, %s229
      %p243 = scmp.eq.s32.totalorder %s27, 1
      %p244 = por %p242, %p243
      %p246 = scmp.ne.s32.totalorder %s229, %s245
      %p247 = scmp.eq.s32.totalorder %s27, 0
      %p248 = por %p246, %p247
      %s249 = ssub.s32 %s21, %s28
      %p250 = scmp.eq.s32.totalorder %s249, 0
      %s252 = sadd.s32 %s251, 1
      %s253 = scalar_select %p250, %s251, %s252
      %p256 = pneg %p250
      %p257 = scmp.eq.s32.totalorder %s21, 1
      %p258 = por %p256, %p257
      %p259 = scmp.ne.s32.totalorder %s251, %s254
      %p260 = scmp.eq.s32.totalorder %s21, 0
      %p261 = por %p259, %p260
      %p262 = scmp.ne.s32.totalorder %s251, %s254
      %p263 = scmp.eq.s32.totalorder %s26, 1
      %p264 = por %p262, %p263
      %p265 = scmp.ne.s32.totalorder %s254, %s255
      %p266 = scmp.eq.s32.totalorder %s26, 0
      %p267 = por %p265, %p266
      %p268 = scmp.ne.s32.totalorder %s254, %s255
      %p269 = scmp.eq.s32.totalorder %s27, 1
      %p270 = por %p268, %p269
      %p272 = scmp.ne.s32.totalorder %s255, %s271
      %p273 = scmp.eq.s32.totalorder %s27, 0
      %p274 = por %p272, %p273
      %p275 = scmp.le.s32.totalorder 1, %s21
      %p276 = scmp.lt.s32.totalorder %s21, 3
      %p277 = pnand %p275, %p276
      %p278 = pneg %p277
      // Predicated region
      $region9: #{tpu_custom_call.1} parent=5 // pred_check
        _
      $region10: #{tpu_custom_call.1} parent=5 // pred_check_branch
        %280 = sbr.rel (%p277) target = $region12
      $region11: #{tpu_custom_call.1} parent=5 // pred_region
        %s281 = ssub.s32 %s21, 1
        // Predicated region
        $region13: #{tpu_custom_call.1} parent=11 // pred_check
          %p282 = pneg %p68
        $region14: #{tpu_custom_call.1} parent=11 // pred_check_branch
          %284 = sbr.rel (%p282) target = $region16
        $region15: #{tpu_custom_call.1} parent=11 // pred_region
          _
        $region16: #{tpu_custom_call.1} parent=11 // pred_fallthru
          _
        // Predicated region
        $region17: #{tpu_custom_call.1} parent=11 // pred_check
          %p285 = pneg %p89
        $region18: #{tpu_custom_call.1} parent=11 // pred_check_branch
          %287 = sbr.rel (%p285) target = $region20
        $region19: #{tpu_custom_call.1} parent=11 // pred_region
          _
        $region20: #{tpu_custom_call.1} parent=11 // pred_fallthru
          _
        // Predicated region
        $region21: #{tpu_custom_call.1} parent=11 // pred_check
          %p288 = pneg %p110
        $region22: #{tpu_custom_call.1} parent=11 // pred_check_branch
          %290 = sbr.rel (%p288) target = $region24
        $region23: #{tpu_custom_call.1} parent=11 // pred_region
          _
        $region24: #{tpu_custom_call.1} parent=11 // pred_fallthru
          _
        // Predicated region
        $region25: #{tpu_custom_call.1} parent=11 // pred_check
          %p291 = pneg %p131
        $region26: #{tpu_custom_call.1} parent=11 // pred_check_branch
          %293 = sbr.rel (%p291) target = $region28
        $region27: #{tpu_custom_call.1} parent=11 // pred_region
          _
        $region28: #{tpu_custom_call.1} parent=11 // pred_fallthru
          _
        // Predicated region
        $region29: #{tpu_custom_call.1} parent=11 // pred_check
          %p294 = pneg %p152
        $region30: #{tpu_custom_call.1} parent=11 // pred_check_branch
          %296 = sbr.rel (%p294) target = $region32
        $region31: #{tpu_custom_call.1} parent=11 // pred_region
          _
        $region32: #{tpu_custom_call.1} parent=11 // pred_fallthru
          _
        // Predicated region
        $region33: #{tpu_custom_call.1} parent=11 // pred_check
          %p297 = pneg %p173
        $region34: #{tpu_custom_call.1} parent=11 // pred_check_branch
          %299 = sbr.rel (%p297) target = $region36
        $region35: #{tpu_custom_call.1} parent=11 // pred_region
          _
        $region36: #{tpu_custom_call.1} parent=11 // pred_fallthru
          _
        // Predicated region
        $region37: #{tpu_custom_call.1} parent=11 // pred_check
          %p300 = pneg %p194
        $region38: #{tpu_custom_call.1} parent=11 // pred_check_branch
          %302 = sbr.rel (%p300) target = $region40
        $region39: #{tpu_custom_call.1} parent=11 // pred_region
          _
        $region40: #{tpu_custom_call.1} parent=11 // pred_fallthru
          _
        // Predicated region
        $region41: #{tpu_custom_call.1} parent=11 // pred_check
          %p303 = pneg %p215
        $region42: #{tpu_custom_call.1} parent=11 // pred_check_branch
          %305 = sbr.rel (%p303) target = $region44
        $region43: #{tpu_custom_call.1} parent=11 // pred_region
          %s307 = ssub.s32 16, 16
          %308 = vsyncadd [#allocation4], %s307
          %s310 = sshll.u32 %s8, 4
          %s311 = int_to_ptr.vmem [resolvable:$true] %s310
          %313 = dma.vmem_to_smem %s311, 16, [#allocation2], [#allocation4]
        $region44: #{tpu_custom_call.1} parent=11 // pred_fallthru
          _
      $region12: #{tpu_custom_call.1} parent=5 // pred_fallthru
        _
      %p314 = scmp.lt.s32.totalorder %s21, 2
      // Predicated region
      $region45: #{tpu_custom_call.1} parent=5 // pred_check
        %p315 = pneg %p314
      $region46: #{tpu_custom_call.1} parent=5 // pred_check_branch
        %317 = sbr.rel (%p315) target = $region48
      $region47: #{tpu_custom_call.1} parent=5 // pred_region
        // Predicated region
        $region49: #{tpu_custom_call.1} parent=47 // pred_check
          %p318 = pneg %p41
        $region50: #{tpu_custom_call.1} parent=47 // pred_check_branch
          %320 = sbr.rel (%p318) target = $region52
        $region51: #{tpu_custom_call.1} parent=47 // pred_region
          %p321 = scmp.lt.s32.totalorder %s21, 1
          %s322 = scalar_select %p321, %s21, 1
          %s323 = smul.addr %s322, 8
          %s324 = smul.addr %s323, 8
          %s325 = scalar_lea.vmem %s0, %s324
        $region52: #{tpu_custom_call.1} parent=47 // pred_fallthru
          _
      $region48: #{tpu_custom_call.1} parent=5 // pred_fallthru
        _
      %p326 = scmp.le.s32.totalorder 1, %s21
      %p327 = scmp.lt.s32.totalorder %s21, 3
      %p328 = pnand %p326, %p327
      %p329 = pneg %p328
      // Predicated region
      $region53: #{tpu_custom_call.1} parent=5 // pred_check
        _
      $region54: #{tpu_custom_call.1} parent=5 // pred_check_branch
        %331 = sbr.rel (%p328) target = $region56
      $region55: #{tpu_custom_call.1} parent=5 // pred_region
        %s332 = ssub.s32 %s21, 1
        // Predicated region
        $region57: #{tpu_custom_call.1} parent=55 // pred_check
          %p333 = pneg %p215
        $region58: #{tpu_custom_call.1} parent=55 // pred_check_branch
          %335 = sbr.rel (%p333) target = $region60
        $region59: #{tpu_custom_call.1} parent=55 // pred_region
          %336 = dma.done [#allocation4], 16
        $region60: #{tpu_custom_call.1} parent=55 // pred_fallthru
          _
        %337 = sfence
        %p338 = scmp.lt.s32.totalorder %s26, 1
        %s339 = scalar_select %p338, %s26, 1
        %s340 = smul.addr %s339, 8
        %s341 = smul.addr %s340, 8
        %s342 = scalar_lea.vmem %s0, %s341
        %p343 = pneg %p47
        %p344 = pneg %p44
        %p345 = pneg %p68
        %p346 = pneg %p65
        %p347 = pneg %p89
        %p348 = pneg %p86
        %p349 = pneg %p110
        %p350 = pneg %p107
        %p351 = pneg %p131
        %p352 = pneg %p128
        %p353 = pneg %p152
        %p354 = pneg %p149
        %p355 = pneg %p173
        %p356 = pneg %p170
        %p357 = pneg %p194
        %p358 = pneg %p191
        %p359 = pneg %p215
        %p360 = pneg %p212
        %p361 = pneg %p241
        %p362 = pneg %p238
        %p363 = scmp.lt.s32.totalorder %s26, 1
        %s364 = scalar_select %p363, %s26, 1
        %s365 = smul.addr %s364, 2
        %s366 = smul.addr %s365, 8
        %s367 = scalar_lea.vmem %s9, %s366
        %p368 = pneg %p267
        %p369 = pneg %p264
        %s370 = sand.u32 %s254, 1
        %s371 = scalar_lea.sflag [#allocation3], %s370
        %s372 = sand.u32 %s254, 1
        %s373 = smul.addr %s372, 64
        %s374 = scalar_lea.vmem [#allocation5], %s373
        %p375 = scmp.lt.s32.totalorder %s26, 1
        %s376 = scalar_select %p375, %s26, 1
        %s377 = smul.addr %s376, 8
        %s378 = smul.addr %s377, 8
        %s379 = scalar_lea.vmem %s0, %s378
        %p380 = scmp.lt.s32.totalorder %s26, 1
        %s381 = scalar_select %p380, %s26, 1
        %s382 = smul.addr %s381, 2
        %s383 = smul.addr %s382, 8
        %s384 = scalar_lea.vmem %s9, %s383
        %v385 = vld [vmem:[%s379] sm:$0xff]
        %v386 = vld [vmem:[%s379 + $0x8] sm:$0xff]
        %v387 = vld [vmem:[%s379 + $0x10] sm:$0xff]
        %v388 = vld [vmem:[%s379 + $0x18] sm:$0xff]
        %v389 = vld [vmem:[%s379 + $0x20] sm:$0xff]
        %v390 = vld [vmem:[%s379 + $0x28] sm:$0xff]
        %v391 = vld [vmem:[%s379 + $0x30] sm:$0xff]
        %v392 = vld [vmem:[%s379 + $0x38] sm:$0xff]
        %v393 = vld [vmem:[%s1] sm:$0xff]
        %v394 = vld [vmem:[%s1 + $0x8] sm:$0xff]
        %v395 = vld [vmem:[%s1 + $0x10] sm:$0xff]
        %v396 = vld [vmem:[%s1 + $0x18] sm:$0xff]
        %v397 = vld [vmem:[%s1 + $0x20] sm:$0xff]
        %v398 = vld [vmem:[%s1 + $0x28] sm:$0xff]
        %v399 = vld [vmem:[%s1 + $0x30] sm:$0xff]
        %v400 = vld [vmem:[%s1 + $0x38] sm:$0xff]
        %v401 = vadd.f32 %v385, %v393
        %v402 = vadd.f32 %v386, %v394
        %v403 = vadd.f32 %v387, %v395
        %v404 = vadd.f32 %v388, %v396
        %v405 = vadd.f32 %v389, %v397
        %v406 = vadd.f32 %v390, %v398
        %v407 = vadd.f32 %v391, %v399
        %v408 = vadd.f32 %v392, %v400
        %v409 = vld [vmem:[%s2] sm:$0xff]
        %v410 = vld [vmem:[%s2 + $0x8] sm:$0xff]
        %v411 = vld [vmem:[%s2 + $0x10] sm:$0xff]
        %v412 = vld [vmem:[%s2 + $0x18] sm:$0xff]
        %v413 = vld [vmem:[%s2 + $0x20] sm:$0xff]
        %v414 = vld [vmem:[%s2 + $0x28] sm:$0xff]
        %v415 = vld [vmem:[%s2 + $0x30] sm:$0xff]
        %v416 = vld [vmem:[%s2 + $0x38] sm:$0xff]
        %v417 = vld [vmem:[%s2 + $0x40] sm:$0xff]
        %v418 = vld [vmem:[%s2 + $0x48] sm:$0xff]
        %v419 = vld [vmem:[%s2 + $0x50] sm:$0xff]
        %v420 = vld [vmem:[%s2 + $0x58] sm:$0xff]
        %v421 = vld [vmem:[%s2 + $0x60] sm:$0xff]
        %v422 = vld [vmem:[%s2 + $0x68] sm:$0xff]
        %v423 = vld [vmem:[%s2 + $0x70] sm:$0xff]
        %v424 = vld [vmem:[%s2 + $0x78] sm:$0xff]
        %v425 = vld [vmem:[%s2 + $0x80] sm:$0xff]
        %v426 = vld [vmem:[%s2 + $0x88] sm:$0xff]
        %v427 = vld [vmem:[%s2 + $0x90] sm:$0xff]
        %v428 = vld [vmem:[%s2 + $0x98] sm:$0xff]
        %v429 = vld [vmem:[%s3] sm:$0xff]
        %v430 = vld [vmem:[%s3 + $0x8] sm:$0xff]
        %v431 = vld [vmem:[%s3 + $0x10] sm:$0xff]
        %v432 = vld [vmem:[%s3 + $0x18] sm:$0xff]
        %v433 = vld [vmem:[%s3 + $0x20] sm:$0xff]
        %v434 = vld [vmem:[%s3 + $0x28] sm:$0xff]
        %v435 = vld [vmem:[%s3 + $0x30] sm:$0xff]
        %v436 = vld [vmem:[%s3 + $0x38] sm:$0xff]
        %v437 = vld [vmem:[%s3 + $0x40] sm:$0xff]
        %v438 = vld [vmem:[%s3 + $0x48] sm:$0xff]
        %v439 = vld [vmem:[%s3 + $0x50] sm:$0xff]
        %v440 = vld [vmem:[%s3 + $0x58] sm:$0xff]
        %v441 = vld [vmem:[%s3 + $0x60] sm:$0xff]
        %v442 = vld [vmem:[%s3 + $0x68] sm:$0xff]
        %v443 = vld [vmem:[%s3 + $0x70] sm:$0xff]
        %v444 = vld [vmem:[%s3 + $0x78] sm:$0xff]
        %v445 = vld [vmem:[%s3 + $0x80] sm:$0xff]
        %v446 = vld [vmem:[%s3 + $0x88] sm:$0xff]
        %v447 = vld [vmem:[%s3 + $0x90] sm:$0xff]
        %v448 = vld [vmem:[%s3 + $0x98] sm:$0xff]
        %450 = vset.pattern.permute.xlu0 0
        %451 = vperm.xlu0 %450, %v429
        %v452 = vpop.permute.xlu0 %451
        %455 = vset.pattern.permute.xlu0 0
        %456 = vperm.xlu0 %455, %v430
        %v457 = vpop.permute.xlu0 %456
        %460 = vset.pattern.permute.xlu0 0
        %461 = vperm.xlu0 %460, %v431
        %v462 = vpop.permute.xlu0 %461
        %465 = vset.pattern.permute.xlu0 0
        %466 = vperm.xlu0 %465, %v432
        %v467 = vpop.permute.xlu0 %466
        %470 = vset.pattern.permute.xlu0 0
        %471 = vperm.xlu0 %470, %v433
        %v472 = vpop.permute.xlu0 %471
        %475 = vset.pattern.permute.xlu0 0
        %476 = vperm.xlu0 %475, %v434
        %v477 = vpop.permute.xlu0 %476
        %480 = vset.pattern.permute.xlu0 0
        %481 = vperm.xlu0 %480, %v435
        %v482 = vpop.permute.xlu0 %481
        %485 = vset.pattern.permute.xlu0 0
        %486 = vperm.xlu0 %485, %v436
        %v487 = vpop.permute.xlu0 %486
        %490 = vset.pattern.permute.xlu0 0
        %491 = vperm.xlu0 %490, %v437
        %v492 = vpop.permute.xlu0 %491
        %495 = vset.pattern.permute.xlu0 0
        %496 = vperm.xlu0 %495, %v438
        %v497 = vpop.permute.xlu0 %496
        %500 = vset.pattern.permute.xlu0 0
        %501 = vperm.xlu0 %500, %v439
        %v502 = vpop.permute.xlu0 %501
        %505 = vset.pattern.permute.xlu0 0
        %506 = vperm.xlu0 %505, %v440
        %v507 = vpop.permute.xlu0 %506
        %510 = vset.pattern.permute.xlu0 0
        %511 = vperm.xlu0 %510, %v441
        %v512 = vpop.permute.xlu0 %511
        %515 = vset.pattern.permute.xlu0 0
        %516 = vperm.xlu0 %515, %v442
        %v517 = vpop.permute.xlu0 %516
        %520 = vset.pattern.permute.xlu0 0
        %521 = vperm.xlu0 %520, %v443
        %v522 = vpop.permute.xlu0 %521
        %525 = vset.pattern.permute.xlu0 0
        %526 = vperm.xlu0 %525, %v444
        %v527 = vpop.permute.xlu0 %526
        %530 = vset.pattern.permute.xlu0 0
        %531 = vperm.xlu0 %530, %v445
        %v532 = vpop.permute.xlu0 %531
        %535 = vset.pattern.permute.xlu0 0
        %536 = vperm.xlu0 %535, %v446
        %v537 = vpop.permute.xlu0 %536
        %540 = vset.pattern.permute.xlu0 0
        %541 = vperm.xlu0 %540, %v447
        %v542 = vpop.permute.xlu0 %541
        %545 = vset.pattern.permute.xlu0 0
        %546 = vperm.xlu0 %545, %v448
        %v547 = vpop.permute.xlu0 %546
        %vm549 = vcmask 261120
        %v551 = vsel %vm549, %v409, 0
        %v554 = vsel %vm549, %v410, 0
        %v557 = vsel %vm549, %v411, 0
        %v560 = vsel %vm549, %v412, 0
        %v563 = vsel %vm549, %v413, 0
        %v566 = vsel %vm549, %v414, 0
        %v569 = vsel %vm549, %v415, 0
        %v572 = vsel %vm549, %v416, 0
        %v575 = vsel %vm549, %v417, 0
        %v578 = vsel %vm549, %v418, 0
        %v581 = vsel %vm549, %v419, 0
        %v584 = vsel %vm549, %v420, 0
        %v587 = vsel %vm549, %v421, 0
        %v590 = vsel %vm549, %v422, 0
        %v593 = vsel %vm549, %v423, 0
        %v596 = vsel %vm549, %v424, 0
        %v599 = vsel %vm549, %v425, 0
        %v602 = vsel %vm549, %v426, 0
        %v605 = vsel %vm549, %v427, 0
        %v608 = vsel %vm549, %v428, 0
        %610 = vmatprep.subr.mxu0 0.0
        %611 = vmatpush1.msra.mxu0 0.0
        %612 = vmatprep.subr.mxu0 0.0
        %613 = vmatpush1.msra.mxu0 0.0
        %614 = vmatprep.subr.mxu0 0.0
        %615 = vmatpush1.msra.mxu0 0.0
        %616 = vmatprep.subr.mxu0 0.0
        %617 = vmatpush1.msra.mxu0 0.0
        %618 = vmatprep.subr.mxu0 0.0
        %619 = vmatpush1.msra.mxu0 0.0
        %620 = vmatprep.subr.mxu0 0.0
        %621 = vmatpush1.msra.mxu0 0.0
        %622 = vmatprep.subr.mxu0 0.0
        %623 = vmatpush1.msra.mxu0 0.0
        %624 = vmatprep.subr.mxu0 0.0
        %625 = vmatpush1.msra.mxu0 0.0
        %626 = vmatprep.subr.mxu0 0.0
        %627 = vmatpush1.msra.mxu0 0.0
        %628 = vmatprep.subr.mxu0 0.0
        %629 = vmatpush1.msra.mxu0 0.0
        %630 = vmatprep.subr.mxu0 0.0
        %631 = vmatpush1.msra.mxu0 0.0
        %632 = vmatprep.subr.mxu0 0.0
        %633 = vmatpush1.msra.mxu0 0.0
        %634 = vmatprep.subr.mxu0 %v408
        %635 = vmatpush1.msra.mxu0 %v407
        %636 = vmatprep.subr.mxu0 %v406
        %637 = vmatpush1.msra.mxu0 %v405
        %638 = vmatprep.subr.mxu0 %v404
        %639 = vmatpush1.msra.mxu0 %v403
        %640 = vmatprep.subr.mxu0 %v402
        %641 = vmatpush1.msra.mxu0 %v401
        %642 = vmatprep.subr.mxu0 0.0
        %643 = vmatpush2.msra.mxu0 0.0
        %644 = vmatprep.subr.mxu0 0.0
        %645 = vmatpush2.msra.mxu0 0.0
        %646 = vmatprep.subr.mxu0 0.0
        %647 = vmatpush2.msra.mxu0 0.0
        %648 = vmatprep.subr.mxu0 0.0
        %649 = vmatpush2.msra.mxu0 0.0
        %650 = vmatprep.subr.mxu0 0.0
        %651 = vmatpush2.msra.mxu0 0.0
        %652 = vmatprep.subr.mxu0 0.0
        %653 = vmatpush2.msra.mxu0 0.0
        %654 = vmatprep.subr.mxu0 0.0
        %655 = vmatpush2.msra.mxu0 0.0
        %656 = vmatprep.subr.mxu0 0.0
        %657 = vmatpush2.msra.mxu0 0.0
        %658 = vmatprep.subr.mxu0 0.0
        %659 = vmatpush2.msra.mxu0 0.0
        %660 = vmatprep.subr.mxu0 0.0
        %661 = vmatpush2.msra.mxu0 0.0
        %662 = vmatprep.subr.mxu0 0.0
        %663 = vmatpush2.msra.mxu0 0.0
        %664 = vmatprep.subr.mxu0 0.0
        %665 = vmatpush2.msra.mxu0 0.0
        %666 = vmatprep.subr.mxu0 0.0
        %667 = vmatpush2.msra.mxu0 0.0
        %668 = vmatprep.subr.mxu0 0.0
        %669 = vmatpush2.msra.mxu0 0.0
        %670 = vmatprep.subr.mxu0 0.0
        %671 = vmatpush2.msra.mxu0 0.0
        %672 = vmatprep.subr.mxu0 0.0
        %673 = vmatpush2.msra.mxu0 0.0
        %674 = vmatprep.mubr.f32.mxu0 0.0
        %675 = vmatmul.mubr.f32.gmra.mxu0 %v551
        %v676 = vpop.f32.mrf.mxu0
        %v677 = vadd.f32 %v452, %v676
        %v678 = vpop.f32.mrf.mxu0
        %v679 = vadd.f32 %v452, %v678
        %680 = vmatprep.mubr.f32.mxu0 0.0
        %681 = vmatmul.mubr.f32.gmra.mxu0 %v554
        %v682 = vpop.f32.mrf.mxu0
        %v683 = vadd.f32 %v457, %v682
        %v684 = vpop.f32.mrf.mxu0
        %v685 = vadd.f32 %v457, %v684
        %686 = vmatprep.mubr.f32.mxu0 0.0
        %687 = vmatmul.mubr.f32.gmra.mxu0 %v557
        %v688 = vpop.f32.mrf.mxu0
        %v689 = vadd.f32 %v462, %v688
        %v690 = vpop.f32.mrf.mxu0
        %v691 = vadd.f32 %v462, %v690
        %692 = vmatprep.mubr.f32.mxu0 0.0
        %693 = vmatmul.mubr.f32.gmra.mxu0 %v560
        %v694 = vpop.f32.mrf.mxu0
        %v695 = vadd.f32 %v467, %v694
        %v696 = vpop.f32.mrf.mxu0
        %v697 = vadd.f32 %v467, %v696
        %698 = vmatprep.mubr.f32.mxu0 0.0
        %699 = vmatmul.mubr.f32.gmra.mxu0 %v563
        %v700 = vpop.f32.mrf.mxu0
        %v701 = vadd.f32 %v472, %v700
        %v702 = vpop.f32.mrf.mxu0
        %v703 = vadd.f32 %v472, %v702
        %704 = vmatprep.mubr.f32.mxu0 0.0
        %705 = vmatmul.mubr.f32.gmra.mxu0 %v566
        %v706 = vpop.f32.mrf.mxu0
        %v707 = vadd.f32 %v477, %v706
        %v708 = vpop.f32.mrf.mxu0
        %v709 = vadd.f32 %v477, %v708
        %710 = vmatprep.mubr.f32.mxu0 0.0
        %711 = vmatmul.mubr.f32.gmra.mxu0 %v569
        %v712 = vpop.f32.mrf.mxu0
        %v713 = vadd.f32 %v482, %v712
        %v714 = vpop.f32.mrf.mxu0
        %v715 = vadd.f32 %v482, %v714
        %716 = vmatprep.mubr.f32.mxu0 0.0
        %717 = vmatmul.mubr.f32.gmra.mxu0 %v572
        %v718 = vpop.f32.mrf.mxu0
        %v719 = vadd.f32 %v487, %v718
        %v720 = vpop.f32.mrf.mxu0
        %v721 = vadd.f32 %v487, %v720
        %722 = vmatprep.mubr.f32.mxu0 0.0
        %723 = vmatmul.mubr.f32.gmra.mxu0 %v575
        %v724 = vpop.f32.mrf.mxu0
        %v725 = vadd.f32 %v492, %v724
        %v726 = vpop.f32.mrf.mxu0
        %v727 = vadd.f32 %v492, %v726
        %728 = vmatprep.mubr.f32.mxu0 0.0
        %729 = vmatmul.mubr.f32.gmra.mxu0 %v578
        %v730 = vpop.f32.mrf.mxu0
        %v731 = vadd.f32 %v497, %v730
        %v732 = vpop.f32.mrf.mxu0
        %v733 = vadd.f32 %v497, %v732
        %734 = vmatprep.mubr.f32.mxu0 0.0
        %735 = vmatmul.mubr.f32.gmra.mxu0 %v581
        %v736 = vpop.f32.mrf.mxu0
        %v737 = vadd.f32 %v502, %v736
        %v738 = vpop.f32.mrf.mxu0
        %v739 = vadd.f32 %v502, %v738
        %740 = vmatprep.mubr.f32.mxu0 0.0
        %741 = vmatmul.mubr.f32.gmra.mxu0 %v584
        %v742 = vpop.f32.mrf.mxu0
        %v743 = vadd.f32 %v507, %v742
        %v744 = vpop.f32.mrf.mxu0
        %v745 = vadd.f32 %v507, %v744
        %746 = vmatprep.mubr.f32.mxu0 0.0
        %747 = vmatmul.mubr.f32.gmra.mxu0 %v587
        %v748 = vpop.f32.mrf.mxu0
        %v749 = vadd.f32 %v512, %v748
        %v750 = vpop.f32.mrf.mxu0
        %v751 = vadd.f32 %v512, %v750
        %752 = vmatprep.mubr.f32.mxu0 0.0
        %753 = vmatmul.mubr.f32.gmra.mxu0 %v590
        %v754 = vpop.f32.mrf.mxu0
        %v755 = vadd.f32 %v517, %v754
        %v756 = vpop.f32.mrf.mxu0
        %v757 = vadd.f32 %v517, %v756
        %758 = vmatprep.mubr.f32.mxu0 0.0
        %759 = vmatmul.mubr.f32.gmra.mxu0 %v593
        %v760 = vpop.f32.mrf.mxu0
        %v761 = vadd.f32 %v522, %v760
        %v762 = vpop.f32.mrf.mxu0
        %v763 = vadd.f32 %v522, %v762
        %764 = vmatprep.mubr.f32.mxu0 0.0
        %765 = vmatmul.mubr.f32.gmra.mxu0 %v596
        %v766 = vpop.f32.mrf.mxu0
        %v767 = vadd.f32 %v527, %v766
        %v768 = vpop.f32.mrf.mxu0
        %v769 = vadd.f32 %v527, %v768
        %770 = vmatprep.mubr.f32.mxu0 0.0
        %771 = vmatmul.mubr.f32.gmra.mxu0 %v599
        %v772 = vpop.f32.mrf.mxu0
        %v773 = vadd.f32 %v532, %v772
        %v774 = vpop.f32.mrf.mxu0
        %v775 = vadd.f32 %v532, %v774
        %776 = vmatprep.mubr.f32.mxu0 0.0
        %777 = vmatmul.mubr.f32.gmra.mxu0 %v602
        %v778 = vpop.f32.mrf.mxu0
        %v779 = vadd.f32 %v537, %v778
        %v780 = vpop.f32.mrf.mxu0
        %v781 = vadd.f32 %v537, %v780
        %782 = vmatprep.mubr.f32.mxu0 0.0
        %783 = vmatmul.mubr.f32.gmra.mxu0 %v605
        %v784 = vpop.f32.mrf.mxu0
        %v785 = vadd.f32 %v542, %v784
        %v786 = vpop.f32.mrf.mxu0
        %v787 = vadd.f32 %v542, %v786
        %788 = vmatprep.mubr.f32.mxu0 0.0
        %789 = vmatmul.mubr.f32.gmra.mxu0 %v608
        %v790 = vpop.f32.mrf.mxu0
        %v791 = vadd.f32 %v547, %v790
        %v792 = vpop.f32.mrf.mxu0
        %v793 = vadd.f32 %v547, %v792
        %794 = vdwg.mxu0
        %v795 = vmax.f32 %v677, 0.0
        %v796 = vmax.f32 %v679, 0.0
        %v797 = vmax.f32 %v683, 0.0
        %v798 = vmax.f32 %v685, 0.0
        %v799 = vmax.f32 %v689, 0.0
        %v800 = vmax.f32 %v691, 0.0
        %v801 = vmax.f32 %v695, 0.0
        %v802 = vmax.f32 %v697, 0.0
        %v803 = vmax.f32 %v701, 0.0
        %v804 = vmax.f32 %v703, 0.0
        %v805 = vmax.f32 %v707, 0.0
        %v806 = vmax.f32 %v709, 0.0
        %v807 = vmax.f32 %v713, 0.0
        %v808 = vmax.f32 %v715, 0.0
        %v809 = vmax.f32 %v719, 0.0
        %v810 = vmax.f32 %v721, 0.0
        %v811 = vmul.f32 %v803, %v725
        %v812 = vmul.f32 %v804, %v727
        %v813 = vmul.f32 %v805, %v731
        %v814 = vmul.f32 %v806, %v733
        %v815 = vmul.f32 %v807, %v737
        %v816 = vmul.f32 %v808, %v739
        %v817 = vmul.f32 %v809, %v743
        %v818 = vmul.f32 %v810, %v745
        %v819 = vadd.f32 %v811, %v812
        %820 = vadd.xlane.f32.xlu0 %v819
        %v821 = vpop.xlane.xlu0 %820
        %v822 = vadd.f32 %v813, %v814
        %823 = vadd.xlane.f32.xlu0 %v822
        %v824 = vpop.xlane.xlu0 %823
        %v825 = vadd.f32 %v815, %v816
        %826 = vadd.xlane.f32.xlu0 %v825
        %v827 = vpop.xlane.xlu0 %826
        %v828 = vadd.f32 %v817, %v818
        %829 = vadd.xlane.f32.xlu0 %v828
        %v830 = vpop.xlane.xlu0 %829
        %v831 = vadd.f32 %v803, %v804
        %832 = vadd.xlane.f32.xlu0 %v831
        %v833 = vpop.xlane.xlu0 %832
        %v834 = vadd.f32 %v805, %v806
        %835 = vadd.xlane.f32.xlu0 %v834
        %v836 = vpop.xlane.xlu0 %835
        %v837 = vadd.f32 %v807, %v808
        %838 = vadd.xlane.f32.xlu0 %v837
        %v839 = vpop.xlane.xlu0 %838
        %v840 = vadd.f32 %v809, %v810
        %841 = vadd.xlane.f32.xlu0 %v840
        %v842 = vpop.xlane.xlu0 %841
        %v843 = vadd.f32 %v833, 1e-06
        %v844 = vadd.f32 %v836, 1e-06
        %v845 = vadd.f32 %v839, 1e-06
        %v846 = vadd.f32 %v842, 1e-06
        %v847 = vmul.f32 %v795, %v843
        %v848 = vmul.f32 %v796, %v843
        %v849 = vmul.f32 %v797, %v844
        %v850 = vmul.f32 %v798, %v844
        %v851 = vmul.f32 %v799, %v845
        %v852 = vmul.f32 %v800, %v845
        %v853 = vmul.f32 %v801, %v846
        %v854 = vmul.f32 %v802, %v846
        %v855 = vadd.f32 %v847, %v849
        %v856 = vadd.f32 %v855, %v851
        %v857 = vadd.f32 %v856, %v853
        %v858 = vrot.slane %v857, 4
        %v859 = vadd.f32 %v857, %v858
        %v860 = vrot.slane %v859, 2
        %v861 = vadd.f32 %v859, %v860
        %v862 = vrot.slane %v861, 1
        %v863 = vadd.f32 %v861, %v862
        %v864 = vadd.f32 %v848, %v850
        %v865 = vadd.f32 %v864, %v852
        %v866 = vadd.f32 %v865, %v854
        %v867 = vrot.slane %v866, 4
        %v868 = vadd.f32 %v866, %v867
        %v869 = vrot.slane %v868, 2
        %v870 = vadd.f32 %v868, %v869
        %v871 = vrot.slane %v870, 1
        %v872 = vadd.f32 %v870, %v871
        %v873 = vmul.f32 %v795, %v821
        %v874 = vmul.f32 %v796, %v821
        %v875 = vmul.f32 %v797, %v824
        %v876 = vmul.f32 %v798, %v824
        %v877 = vmul.f32 %v799, %v827
        %v878 = vmul.f32 %v800, %v827
        %v879 = vmul.f32 %v801, %v830
        %v880 = vmul.f32 %v802, %v830
        %v881 = vrcp.pop %v863
        %v882 = vrcp.pop %v872
        %v883 = vmul.f32 %v873, %v881
        %v884 = vmul.f32 %v874, %v882
        %v885 = vmul.f32 %v875, %v881
        %v886 = vmul.f32 %v876, %v882
        %v887 = vmul.f32 %v877, %v881
        %v888 = vmul.f32 %v878, %v882
        %v889 = vmul.f32 %v879, %v881
        %v890 = vmul.f32 %v880, %v882
        %891 = vmatprep.subr.mxu0 0.0
        %892 = vmatpush1.xpose.msra.mxu0 0.0
        %893 = vmatprep.subr.mxu0 0.0
        %894 = vmatpush1.xpose.msra.mxu0 0.0
        %895 = vmatprep.subr.mxu0 0.0
        %896 = vmatpush1.xpose.msra.mxu0 0.0
        %897 = vmatprep.subr.mxu0 0.0
        %898 = vmatpush1.xpose.msra.mxu0 0.0
        %899 = vmatprep.subr.mxu0 0.0
        %900 = vmatpush1.xpose.msra.mxu0 0.0
        %901 = vmatprep.subr.mxu0 0.0
        %902 = vmatpush1.xpose.msra.mxu0 0.0
        %903 = vmatprep.subr.mxu0 0.0
        %904 = vmatpush1.xpose.msra.mxu0 0.0
        %905 = vmatprep.subr.mxu0 0.0
        %906 = vmatpush1.xpose.msra.mxu0 0.0
        %907 = vmatprep.subr.mxu0 0.0
        %908 = vmatpush1.xpose.msra.mxu0 0.0
        %909 = vmatprep.subr.mxu0 0.0
        %910 = vmatpush1.xpose.msra.mxu0 0.0
        %911 = vmatprep.subr.mxu0 0.0
        %912 = vmatpush1.xpose.msra.mxu0 0.0
        %913 = vmatprep.subr.mxu0 0.0
        %914 = vmatpush1.xpose.msra.mxu0 0.0
        %915 = vmatprep.subr.mxu0 %v793
        %916 = vmatpush1.xpose.msra.mxu0 %v791
        %917 = vmatprep.subr.mxu0 %v787
        %918 = vmatpush1.xpose.msra.mxu0 %v785
        %919 = vmatprep.subr.mxu0 %v781
        %920 = vmatpush1.xpose.msra.mxu0 %v779
        %921 = vmatprep.subr.mxu0 %v775
        %922 = vmatpush1.xpose.msra.mxu0 %v773
        %923 = vmatprep.subr.mxu0 0.0
        %924 = vmatpush2.xpose.msra.mxu0 0.0
        %925 = vmatprep.subr.mxu0 0.0
        %926 = vmatpush2.xpose.msra.mxu0 0.0
        %927 = vmatprep.subr.mxu0 0.0
        %928 = vmatpush2.xpose.msra.mxu0 0.0
        %929 = vmatprep.subr.mxu0 0.0
        %930 = vmatpush2.xpose.msra.mxu0 0.0
        %931 = vmatprep.subr.mxu0 0.0
        %932 = vmatpush2.xpose.msra.mxu0 0.0
        %933 = vmatprep.subr.mxu0 0.0
        %934 = vmatpush2.xpose.msra.mxu0 0.0
        %935 = vmatprep.subr.mxu0 0.0
        %936 = vmatpush2.xpose.msra.mxu0 0.0
        %937 = vmatprep.subr.mxu0 0.0
        %938 = vmatpush2.xpose.msra.mxu0 0.0
        %939 = vmatprep.subr.mxu0 0.0
        %940 = vmatpush2.xpose.msra.mxu0 0.0
        %941 = vmatprep.subr.mxu0 0.0
        %942 = vmatpush2.xpose.msra.mxu0 0.0
        %943 = vmatprep.subr.mxu0 0.0
        %944 = vmatpush2.xpose.msra.mxu0 0.0
        %945 = vmatprep.subr.mxu0 0.0
        %946 = vmatpush2.xpose.msra.mxu0 0.0
        %947 = vmatprep.subr.mxu0 0.0
        %948 = vmatpush2.xpose.msra.mxu0 0.0
        %949 = vmatprep.subr.mxu0 0.0
        %950 = vmatpush2.xpose.msra.mxu0 0.0
        %951 = vmatprep.subr.mxu0 0.0
        %952 = vmatpush2.xpose.msra.mxu0 0.0
        %953 = vmatprep.subr.mxu0 0.0
        %954 = vmatpush2.xpose.msra.mxu0 0.0
        %955 = vmatprep.mubr.f32.mxu0 %v751
        %956 = vmatmul.mubr.f32.gmra.mxu0 %v749
        %v957 = vpop.f32.mrf.mxu0
        %v958 = vadd.f32 0.0, %v957
        %v959 = vpop.f32.mrf.mxu0
        %960 = vmatprep.mubr.f32.mxu0 %v757
        %961 = vmatmul.mubr.f32.gmra.mxu0 %v755
        %v962 = vpop.f32.mrf.mxu0
        %v963 = vadd.f32 0.0, %v962
        %v964 = vpop.f32.mrf.mxu0
        %965 = vmatprep.mubr.f32.mxu0 %v763
        %966 = vmatmul.mubr.f32.gmra.mxu0 %v761
        %v967 = vpop.f32.mrf.mxu0
        %v968 = vadd.f32 0.0, %v967
        %v969 = vpop.f32.mrf.mxu0
        %970 = vmatprep.mubr.f32.mxu0 %v769
        %971 = vmatmul.mubr.f32.gmra.mxu0 %v767
        %v972 = vpop.f32.mrf.mxu0
        %v973 = vadd.f32 0.0, %v972
        %v974 = vpop.f32.mrf.mxu0
        %975 = vdwg.mxu0
        %v976 = vsel %vm549, %v958, -inf
        %977 = vmax.xlane.f32.xlu0 %v976
        %v978 = vpop.xlane.xlu0 %977
        %v979 = vsel %vm549, %v963, -inf
        %980 = vmax.xlane.f32.xlu0 %v979
        %v981 = vpop.xlane.xlu0 %980
        %v982 = vsel %vm549, %v968, -inf
        %983 = vmax.xlane.f32.xlu0 %v982
        %v984 = vpop.xlane.xlu0 %983
        %v985 = vsel %vm549, %v973, -inf
        %986 = vmax.xlane.f32.xlu0 %v985
        %v987 = vpop.xlane.xlu0 %986
        %v988 = vsub.f32 %v958, %v978
        %v989 = vsub.f32 %v963, %v981
        %v990 = vsub.f32 %v968, %v984
        %v991 = vsub.f32 %v973, %v987
        %v992 = vmul.f32 %v988, 1.442695
        %v993 = vpow.pop %v992
        %v994 = vmul.f32 %v989, 1.442695
        %v995 = vpow.pop %v994
        %v996 = vmul.f32 %v990, 1.442695
        %v997 = vpow.pop %v996
        %v998 = vmul.f32 %v991, 1.442695
        %v999 = vpow.pop %v998
        %v1000 = vsel %vm549, %v993, 0.0
        %1001 = vadd.xlane.f32.xlu0 %v1000
        %v1002 = vpop.xlane.xlu0 %1001
        %v1003 = vsel %vm549, %v995, 0.0
        %1004 = vadd.xlane.f32.xlu0 %v1003
        %v1005 = vpop.xlane.xlu0 %1004
        %v1006 = vsel %vm549, %v997, 0.0
        %1007 = vadd.xlane.f32.xlu0 %v1006
        %v1008 = vpop.xlane.xlu0 %1007
        %v1009 = vsel %vm549, %v999, 0.0
        %1010 = vadd.xlane.f32.xlu0 %v1009
        %v1011 = vpop.xlane.xlu0 %1010
        %v1012 = vrcp.pop %v1002
        %v1013 = vrcp.pop %v1005
        %v1014 = vrcp.pop %v1008
        %v1015 = vrcp.pop %v1011
        %v1016 = vmul.f32 %v993, %v1012
        %v1017 = vmul.f32 %v995, %v1013
        %v1018 = vmul.f32 %v997, %v1014
        %v1019 = vmul.f32 %v999, %v1015
        %1020 = vxpose.xlu0.b32.start [1/16] %v1016, 128
        %1021 = vxpose.xlu0.b32.cont [2/16] %v1017, 128
        %1022 = vxpose.xlu0.b32.cont [3/16] %v1018, 128
        %1023 = vxpose.xlu0.b32.cont [4/16] %v1019, 128
        %1024 = vxpose.xlu0.b32.cont [5/16] 0.0, 128
        %1025 = vxpose.xlu0.b32.cont [6/16] 0.0, 128
        %1026 = vxpose.xlu0.b32.cont [7/16] 0.0, 128
        %1027 = vxpose.xlu0.b32.cont [8/16] 0.0, 128
        %1028 = vxpose.xlu0.b32.cont [9/16] 0.0, 128
        %1029 = vxpose.xlu0.b32.cont [10/16] 0.0, 128
        %1030 = vxpose.xlu0.b32.cont [11/16] 0.0, 128
        %1031 = vxpose.xlu0.b32.cont [12/16] 0.0, 128
        %1032 = vxpose.xlu0.b32.cont [13/16] 0.0, 128
        %1033 = vxpose.xlu0.b32.cont [14/16] 0.0, 128
        %1034 = vxpose.xlu0.b32.cont [15/16] 0.0, 128
        %1035 = vxpose.xlu0.b32.end [16/16] 0.0, 128
        %v1036 = vpop.trf.xlu0
        %v1037 = vpop.trf.xlu0
        %v1038 = vpop.trf.xlu0
        %v1039 = vpop.trf.xlu0
        %v1040 = vpop.trf.xlu0
        %v1041 = vpop.trf.xlu0
        %v1042 = vpop.trf.xlu0
        %v1043 = vpop.trf.xlu0
        %v1044 = vpop.trf.xlu0
        %v1045 = vpop.trf.xlu0
        %v1046 = vpop.trf.xlu0
        %v1047 = vpop.trf.xlu0
        %v1048 = vpop.trf.xlu0
        %v1049 = vpop.trf.xlu0
        %v1050 = vpop.trf.xlu0
        %v1051 = vpop.trf.xlu0
        %v1053 = vsel %vm549, %v1036, 0
        %v1056 = vsel %vm549, %v1037, 0
        %v1059 = vsel %vm549, %v1038, 0
        %v1062 = vsel %vm549, %v1039, 0
        %1064 = vmatprep.subr.mxu0 0.0
        %1065 = vmatpush1.msra.mxu0 0.0
        %1066 = vmatprep.subr.mxu0 0.0
        %1067 = vmatpush1.msra.mxu0 0.0
        %1068 = vmatprep.subr.mxu0 0.0
        %1069 = vmatpush1.msra.mxu0 0.0
        %1070 = vmatprep.subr.mxu0 0.0
        %1071 = vmatpush1.msra.mxu0 0.0
        %1072 = vmatprep.subr.mxu0 0.0
        %1073 = vmatpush1.msra.mxu0 0.0
        %1074 = vmatprep.subr.mxu0 0.0
        %1075 = vmatpush1.msra.mxu0 0.0
        %1076 = vmatprep.subr.mxu0 0.0
        %1077 = vmatpush1.msra.mxu0 0.0
        %1078 = vmatprep.subr.mxu0 0.0
        %1079 = vmatpush1.msra.mxu0 0.0
        %1080 = vmatprep.subr.mxu0 0.0
        %1081 = vmatpush1.msra.mxu0 0.0
        %1082 = vmatprep.subr.mxu0 0.0
        %1083 = vmatpush1.msra.mxu0 0.0
        %1084 = vmatprep.subr.mxu0 0.0
        %1085 = vmatpush1.msra.mxu0 0.0
        %1086 = vmatprep.subr.mxu0 0.0
        %1087 = vmatpush1.msra.mxu0 0.0
        %1088 = vmatprep.subr.mxu0 %v890
        %1089 = vmatpush1.msra.mxu0 %v889
        %1090 = vmatprep.subr.mxu0 %v888
        %1091 = vmatpush1.msra.mxu0 %v887
        %1092 = vmatprep.subr.mxu0 %v886
        %1093 = vmatpush1.msra.mxu0 %v885
        %1094 = vmatprep.subr.mxu0 %v884
        %1095 = vmatpush1.msra.mxu0 %v883
        %1096 = vmatprep.subr.mxu0 0.0
        %1097 = vmatpush2.msra.mxu0 0.0
        %1098 = vmatprep.subr.mxu0 0.0
        %1099 = vmatpush2.msra.mxu0 0.0
        %1100 = vmatprep.subr.mxu0 0.0
        %1101 = vmatpush2.msra.mxu0 0.0
        %1102 = vmatprep.subr.mxu0 0.0
        %1103 = vmatpush2.msra.mxu0 0.0
        %1104 = vmatprep.subr.mxu0 0.0
        %1105 = vmatpush2.msra.mxu0 0.0
        %1106 = vmatprep.subr.mxu0 0.0
        %1107 = vmatpush2.msra.mxu0 0.0
        %1108 = vmatprep.subr.mxu0 0.0
        %1109 = vmatpush2.msra.mxu0 0.0
        %1110 = vmatprep.subr.mxu0 0.0
        %1111 = vmatpush2.msra.mxu0 0.0
        %1112 = vmatprep.subr.mxu0 0.0
        %1113 = vmatpush2.msra.mxu0 0.0
        %1114 = vmatprep.subr.mxu0 0.0
        %1115 = vmatpush2.msra.mxu0 0.0
        %1116 = vmatprep.subr.mxu0 0.0
        %1117 = vmatpush2.msra.mxu0 0.0
        %1118 = vmatprep.subr.mxu0 0.0
        %1119 = vmatpush2.msra.mxu0 0.0
        %1120 = vmatprep.subr.mxu0 0.0
        %1121 = vmatpush2.msra.mxu0 0.0
        %1122 = vmatprep.subr.mxu0 0.0
        %1123 = vmatpush2.msra.mxu0 0.0
        %1124 = vmatprep.subr.mxu0 0.0
        %1125 = vmatpush2.msra.mxu0 0.0
        %1126 = vmatprep.subr.mxu0 0.0
        %1127 = vmatpush2.msra.mxu0 0.0
        %1128 = vmatprep.mubr.f32.mxu0 0.0
        %1129 = vmatmul.mubr.f32.gmra.mxu0 %v1053
        %v1130 = vpop.f32.mrf.mxu0
        %v1131 = vadd.f32 0.0, %v1130
        %v1132 = vpop.f32.mrf.mxu0
        %v1133 = vadd.f32 0.0, %v1132
        %1134 = vmatprep.mubr.f32.mxu0 0.0
        %1135 = vmatmul.mubr.f32.gmra.mxu0 %v1056
        %v1136 = vpop.f32.mrf.mxu0
        %v1137 = vadd.f32 0.0, %v1136
        %v1138 = vpop.f32.mrf.mxu0
        %v1139 = vadd.f32 0.0, %v1138
        %1140 = vmatprep.mubr.f32.mxu0 0.0
        %1141 = vmatmul.mubr.f32.gmra.mxu0 %v1059
        %v1142 = vpop.f32.mrf.mxu0
        %v1143 = vadd.f32 0.0, %v1142
        %v1144 = vpop.f32.mrf.mxu0
        %v1145 = vadd.f32 0.0, %v1144
        %1146 = vmatprep.mubr.f32.mxu0 0.0
        %1147 = vmatmul.mubr.f32.gmra.mxu0 %v1062
        %v1148 = vpop.f32.mrf.mxu0
        %v1149 = vadd.f32 0.0, %v1148
        %v1150 = vpop.f32.mrf.mxu0
        %v1151 = vadd.f32 0.0, %v1150
        %1152 = vdwg.mxu0
        %s1153 = sld [smem:[#allocation2]]
        %v1154 = vstv %s1153
        %v1155 = vmul.f32 %v1154, %v1131
        %v1156 = vmul.f32 %v1154, %v1133
        %v1157 = vmul.f32 %v1154, %v1137
        %v1158 = vmul.f32 %v1154, %v1139
        %v1159 = vmul.f32 %v1154, %v1143
        %v1160 = vmul.f32 %v1154, %v1145
        %v1161 = vmul.f32 %v1154, %v1149
        %v1162 = vmul.f32 %v1154, %v1151
        %v1163 = vadd.f32 %v401, %v1155
        %v1164 = vadd.f32 %v402, %v1156
        %v1165 = vadd.f32 %v403, %v1157
        %v1166 = vadd.f32 %v404, %v1158
        %v1167 = vadd.f32 %v405, %v1159
        %v1168 = vadd.f32 %v406, %v1160
        %v1169 = vadd.f32 %v407, %v1161
        %v1170 = vadd.f32 %v408, %v1162
        %v1171 = vld [vmem:[%s4] sm:$0xff]
        %v1172 = vld [vmem:[%s4 + $0x8] sm:$0xff]
        %v1173 = vld [vmem:[%s4 + $0x10] sm:$0xff]
        %v1174 = vld [vmem:[%s4 + $0x18] sm:$0xff]
        %1176 = vset.pattern.permute.xlu0 0
        %1177 = vperm.xlu0 %1176, %v1171
        %v1178 = vpop.permute.xlu0 %1177
        %1181 = vset.pattern.permute.xlu0 0
        %1182 = vperm.xlu0 %1181, %v1172
        %v1183 = vpop.permute.xlu0 %1182
        %1186 = vset.pattern.permute.xlu0 0
        %1187 = vperm.xlu0 %1186, %v1173
        %v1188 = vpop.permute.xlu0 %1187
        %1191 = vset.pattern.permute.xlu0 0
        %1192 = vperm.xlu0 %1191, %v1174
        %v1193 = vpop.permute.xlu0 %1192
        %v1195 = vmul.f32 %v1163, %v1178
        %v1196 = vmul.f32 %v1164, %v1178
        %v1197 = vmul.f32 %v1165, %v1183
        %v1198 = vmul.f32 %v1166, %v1183
        %v1199 = vmul.f32 %v1167, %v1188
        %v1200 = vmul.f32 %v1168, %v1188
        %v1201 = vmul.f32 %v1169, %v1193
        %v1202 = vmul.f32 %v1170, %v1193
        %v1203 = vld [vmem:[%s5] sm:$0xff]
        %v1204 = vld [vmem:[%s5 + $0x8] sm:$0xff]
        %v1205 = vld [vmem:[%s5 + $0x10] sm:$0xff]
        %v1206 = vld [vmem:[%s5 + $0x18] sm:$0xff]
        %1208 = vset.pattern.permute.xlu0 0
        %1209 = vperm.xlu0 %1208, %v1203
        %v1210 = vpop.permute.xlu0 %1209
        %1213 = vset.pattern.permute.xlu0 0
        %1214 = vperm.xlu0 %1213, %v1204
        %v1215 = vpop.permute.xlu0 %1214
        %1218 = vset.pattern.permute.xlu0 0
        %1219 = vperm.xlu0 %1218, %v1205
        %v1220 = vpop.permute.xlu0 %1219
        %1223 = vset.pattern.permute.xlu0 0
        %1224 = vperm.xlu0 %1223, %v1206
        %v1225 = vpop.permute.xlu0 %1224
        %v1227 = vadd.f32 %v1195, %v1210
        %v1228 = vadd.f32 %v1196, %v1210
        %v1229 = vadd.f32 %v1197, %v1215
        %v1230 = vadd.f32 %v1198, %v1215
        %v1231 = vadd.f32 %v1199, %v1220
        %v1232 = vadd.f32 %v1200, %v1220
        %v1233 = vadd.f32 %v1201, %v1225
        %v1234 = vadd.f32 %v1202, %v1225
        %v1235 = vmax.f32 %v1227, 0.0
        %v1236 = vmax.f32 %v1228, 0.0
        %v1237 = vmax.f32 %v1229, 0.0
        %v1238 = vmax.f32 %v1230, 0.0
        %v1239 = vmax.f32 %v1231, 0.0
        %v1240 = vmax.f32 %v1232, 0.0
        %v1241 = vmax.f32 %v1233, 0.0
        %v1242 = vmax.f32 %v1234, 0.0
        %s1243 = scalar_lea.vmem %s1, 64
        %v1244 = vld [vmem:[%s1243] sm:$0xff]
        %v1245 = vld [vmem:[%s1243 + $0x8] sm:$0xff]
        %v1246 = vld [vmem:[%s1243 + $0x10] sm:$0xff]
        %v1247 = vld [vmem:[%s1243 + $0x18] sm:$0xff]
        %v1248 = vld [vmem:[%s1243 + $0x20] sm:$0xff]
        %v1249 = vld [vmem:[%s1243 + $0x28] sm:$0xff]
        %v1250 = vld [vmem:[%s1243 + $0x30] sm:$0xff]
        %v1251 = vld [vmem:[%s1243 + $0x38] sm:$0xff]
        %v1252 = vadd.f32 %v1235, %v1244
        %v1253 = vadd.f32 %v1236, %v1245
        %v1254 = vadd.f32 %v1237, %v1246
        %v1255 = vadd.f32 %v1238, %v1247
        %v1256 = vadd.f32 %v1239, %v1248
        %v1257 = vadd.f32 %v1240, %v1249
        %v1258 = vadd.f32 %v1241, %v1250
        %v1259 = vadd.f32 %v1242, %v1251
        %s1260 = scalar_lea.vmem %s2, 160
        %v1261 = vld [vmem:[%s1260] sm:$0xff]
        %v1262 = vld [vmem:[%s1260 + $0x8] sm:$0xff]
        %v1263 = vld [vmem:[%s1260 + $0x10] sm:$0xff]
        %v1264 = vld [vmem:[%s1260 + $0x18] sm:$0xff]
        %v1265 = vld [vmem:[%s1260 + $0x20] sm:$0xff]
        %v1266 = vld [vmem:[%s1260 + $0x28] sm:$0xff]
        %v1267 = vld [vmem:[%s1260 + $0x30] sm:$0xff]
        %v1268 = vld [vmem:[%s1260 + $0x38] sm:$0xff]
        %v1269 = vld [vmem:[%s1260 + $0x40] sm:$0xff]
        %v1270 = vld [vmem:[%s1260 + $0x48] sm:$0xff]
        %v1271 = vld [vmem:[%s1260 + $0x50] sm:$0xff]
        %v1272 = vld [vmem:[%s1260 + $0x58] sm:$0xff]
        %v1273 = vld [vmem:[%s1260 + $0x60] sm:$0xff]
        %v1274 = vld [vmem:[%s1260 + $0x68] sm:$0xff]
        %v1275 = vld [vmem:[%s1260 + $0x70] sm:$0xff]
        %v1276 = vld [vmem:[%s1260 + $0x78] sm:$0xff]
        %v1277 = vld [vmem:[%s1260 + $0x80] sm:$0xff]
        %v1278 = vld [vmem:[%s1260 + $0x88] sm:$0xff]
        %v1279 = vld [vmem:[%s1260 + $0x90] sm:$0xff]
        %v1280 = vld [vmem:[%s1260 + $0x98] sm:$0xff]
        %s1281 = scalar_lea.vmem %s3, 160
        %v1282 = vld [vmem:[%s1281] sm:$0xff]
        %v1283 = vld [vmem:[%s1281 + $0x8] sm:$0xff]
        %v1284 = vld [vmem:[%s1281 + $0x10] sm:$0xff]
        %v1285 = vld [vmem:[%s1281 + $0x18] sm:$0xff]
        %v1286 = vld [vmem:[%s1281 + $0x20] sm:$0xff]
        %v1287 = vld [vmem:[%s1281 + $0x28] sm:$0xff]
        %v1288 = vld [vmem:[%s1281 + $0x30] sm:$0xff]
        %v1289 = vld [vmem:[%s1281 + $0x38] sm:$0xff]
        %v1290 = vld [vmem:[%s1281 + $0x40] sm:$0xff]
        %v1291 = vld [vmem:[%s1281 + $0x48] sm:$0xff]
        %v1292 = vld [vmem:[%s1281 + $0x50] sm:$0xff]
        %v1293 = vld [vmem:[%s1281 + $0x58] sm:$0xff]
        %v1294 = vld [vmem:[%s1281 + $0x60] sm:$0xff]
        %v1295 = vld [vmem:[%s1281 + $0x68] sm:$0xff]
        %v1296 = vld [vmem:[%s1281 + $0x70] sm:$0xff]
        %v1297 = vld [vmem:[%s1281 + $0x78] sm:$0xff]
        %v1298 = vld [vmem:[%s1281 + $0x80] sm:$0xff]
        %v1299 = vld [vmem:[%s1281 + $0x88] sm:$0xff]
        %v1300 = vld [vmem:[%s1281 + $0x90] sm:$0xff]
        %v1301 = vld [vmem:[%s1281 + $0x98] sm:$0xff]
        %1303 = vset.pattern.permute.xlu0 0
        %1304 = vperm.xlu0 %1303, %v1282
        %v1305 = vpop.permute.xlu0 %1304
        %1308 = vset.pattern.permute.xlu0 0
        %1309 = vperm.xlu0 %1308, %v1283
        %v1310 = vpop.permute.xlu0 %1309
        %1313 = vset.pattern.permute.xlu0 0
        %1314 = vperm.xlu0 %1313, %v1284
        %v1315 = vpop.permute.xlu0 %1314
        %1318 = vset.pattern.permute.xlu0 0
        %1319 = vperm.xlu0 %1318, %v1285
        %v1320 = vpop.permute.xlu0 %1319
        %1323 = vset.pattern.permute.xlu0 0
        %1324 = vperm.xlu0 %1323, %v1286
        %v1325 = vpop.permute.xlu0 %1324
        %1328 = vset.pattern.permute.xlu0 0
        %1329 = vperm.xlu0 %1328, %v1287
        %v1330 = vpop.permute.xlu0 %1329
        %1333 = vset.pattern.permute.xlu0 0
        %1334 = vperm.xlu0 %1333, %v1288
        %v1335 = vpop.permute.xlu0 %1334
        %1338 = vset.pattern.permute.xlu0 0
        %1339 = vperm.xlu0 %1338, %v1289
        %v1340 = vpop.permute.xlu0 %1339
        %1343 = vset.pattern.permute.xlu0 0
        %1344 = vperm.xlu0 %1343, %v1290
        %v1345 = vpop.permute.xlu0 %1344
        %1348 = vset.pattern.permute.xlu0 0
        %1349 = vperm.xlu0 %1348, %v1291
        %v1350 = vpop.permute.xlu0 %1349
        %1353 = vset.pattern.permute.xlu0 0
        %1354 = vperm.xlu0 %1353, %v1292
        %v1355 = vpop.permute.xlu0 %1354
        %1358 = vset.pattern.permute.xlu0 0
        %1359 = vperm.xlu0 %1358, %v1293
        %v1360 = vpop.permute.xlu0 %1359
        %1363 = vset.pattern.permute.xlu0 0
        %1364 = vperm.xlu0 %1363, %v1294
        %v1365 = vpop.permute.xlu0 %1364
        %1368 = vset.pattern.permute.xlu0 0
        %1369 = vperm.xlu0 %1368, %v1295
        %v1370 = vpop.permute.xlu0 %1369
        %1373 = vset.pattern.permute.xlu0 0
        %1374 = vperm.xlu0 %1373, %v1296
        %v1375 = vpop.permute.xlu0 %1374
        %1378 = vset.pattern.permute.xlu0 0
        %1379 = vperm.xlu0 %1378, %v1297
        %v1380 = vpop.permute.xlu0 %1379
        %1383 = vset.pattern.permute.xlu0 0
        %1384 = vperm.xlu0 %1383, %v1298
        %v1385 = vpop.permute.xlu0 %1384
        %1388 = vset.pattern.permute.xlu0 0
        %1389 = vperm.xlu0 %1388, %v1299
        %v1390 = vpop.permute.xlu0 %1389
        %1393 = vset.pattern.permute.xlu0 0
        %1394 = vperm.xlu0 %1393, %v1300
        %v1395 = vpop.permute.xlu0 %1394
        %1398 = vset.pattern.permute.xlu0 0
        %1399 = vperm.xlu0 %1398, %v1301
        %v1400 = vpop.permute.xlu0 %1399
        %v1403 = vsel %vm549, %v1261, 0
        %v1406 = vsel %vm549, %v1262, 0
        %v1409 = vsel %vm549, %v1263, 0
        %v1412 = vsel %vm549, %v1264, 0
        %v1415 = vsel %vm549, %v1265, 0
        %v1418 = vsel %vm549, %v1266, 0
        %v1421 = vsel %vm549, %v1267, 0
        %v1424 = vsel %vm549, %v1268, 0
        %v1427 = vsel %vm549, %v1269, 0
        %v1430 = vsel %vm549, %v1270, 0
        %v1433 = vsel %vm549, %v1271, 0
        %v1436 = vsel %vm549, %v1272, 0
        %v1439 = vsel %vm549, %v1273, 0
        %v1442 = vsel %vm549, %v1274, 0
        %v1445 = vsel %vm549, %v1275, 0
        %v1448 = vsel %vm549, %v1276, 0
        %v1451 = vsel %vm549, %v1277, 0
        %v1454 = vsel %vm549, %v1278, 0
        %v1457 = vsel %vm549, %v1279, 0
        %v1460 = vsel %vm549, %v1280, 0
        %1462 = vmatprep.subr.mxu0 0.0
        %1463 = vmatpush1.msra.mxu0 0.0
        %1464 = vmatprep.subr.mxu0 0.0
        %1465 = vmatpush1.msra.mxu0 0.0
        %1466 = vmatprep.subr.mxu0 0.0
        %1467 = vmatpush1.msra.mxu0 0.0
        %1468 = vmatprep.subr.mxu0 0.0
        %1469 = vmatpush1.msra.mxu0 0.0
        %1470 = vmatprep.subr.mxu0 0.0
        %1471 = vmatpush1.msra.mxu0 0.0
        %1472 = vmatprep.subr.mxu0 0.0
        %1473 = vmatpush1.msra.mxu0 0.0
        %1474 = vmatprep.subr.mxu0 0.0
        %1475 = vmatpush1.msra.mxu0 0.0
        %1476 = vmatprep.subr.mxu0 0.0
        %1477 = vmatpush1.msra.mxu0 0.0
        %1478 = vmatprep.subr.mxu0 0.0
        %1479 = vmatpush1.msra.mxu0 0.0
        %1480 = vmatprep.subr.mxu0 0.0
        %1481 = vmatpush1.msra.mxu0 0.0
        %1482 = vmatprep.subr.mxu0 0.0
        %1483 = vmatpush1.msra.mxu0 0.0
        %1484 = vmatprep.subr.mxu0 0.0
        %1485 = vmatpush1.msra.mxu0 0.0
        %1486 = vmatprep.subr.mxu0 %v1259
        %1487 = vmatpush1.msra.mxu0 %v1258
        %1488 = vmatprep.subr.mxu0 %v1257
        %1489 = vmatpush1.msra.mxu0 %v1256
        %1490 = vmatprep.subr.mxu0 %v1255
        %1491 = vmatpush1.msra.mxu0 %v1254
        %1492 = vmatprep.subr.mxu0 %v1253
        %1493 = vmatpush1.msra.mxu0 %v1252
        %1494 = vmatprep.subr.mxu0 0.0
        %1495 = vmatpush2.msra.mxu0 0.0
        %1496 = vmatprep.subr.mxu0 0.0
        %1497 = vmatpush2.msra.mxu0 0.0
        %1498 = vmatprep.subr.mxu0 0.0
        %1499 = vmatpush2.msra.mxu0 0.0
        %1500 = vmatprep.subr.mxu0 0.0
        %1501 = vmatpush2.msra.mxu0 0.0
        %1502 = vmatprep.subr.mxu0 0.0
        %1503 = vmatpush2.msra.mxu0 0.0
        %1504 = vmatprep.subr.mxu0 0.0
        %1505 = vmatpush2.msra.mxu0 0.0
        %1506 = vmatprep.subr.mxu0 0.0
        %1507 = vmatpush2.msra.mxu0 0.0
        %1508 = vmatprep.subr.mxu0 0.0
        %1509 = vmatpush2.msra.mxu0 0.0
        %1510 = vmatprep.subr.mxu0 0.0
        %1511 = vmatpush2.msra.mxu0 0.0
        %1512 = vmatprep.subr.mxu0 0.0
        %1513 = vmatpush2.msra.mxu0 0.0
        %1514 = vmatprep.subr.mxu0 0.0
        %1515 = vmatpush2.msra.mxu0 0.0
        %1516 = vmatprep.subr.mxu0 0.0
        %1517 = vmatpush2.msra.mxu0 0.0
        %1518 = vmatprep.subr.mxu0 0.0
        %1519 = vmatpush2.msra.mxu0 0.0
        %1520 = vmatprep.subr.mxu0 0.0
        %1521 = vmatpush2.msra.mxu0 0.0
        %1522 = vmatprep.subr.mxu0 0.0
        %1523 = vmatpush2.msra.mxu0 0.0
        %1524 = vmatprep.subr.mxu0 0.0
        %1525 = vmatpush2.msra.mxu0 0.0
        %1526 = vmatprep.mubr.f32.mxu0 0.0
        %1527 = vmatmul.mubr.f32.gmra.mxu0 %v1403
        %v1528 = vpop.f32.mrf.mxu0
        %v1529 = vadd.f32 %v1305, %v1528
        %v1530 = vpop.f32.mrf.mxu0
        %v1531 = vadd.f32 %v1305, %v1530
        %1532 = vmatprep.mubr.f32.mxu0 0.0
        %1533 = vmatmul.mubr.f32.gmra.mxu0 %v1406
        %v1534 = vpop.f32.mrf.mxu0
        %v1535 = vadd.f32 %v1310, %v1534
        %v1536 = vpop.f32.mrf.mxu0
        %v1537 = vadd.f32 %v1310, %v1536
        %1538 = vmatprep.mubr.f32.mxu0 0.0
        %1539 = vmatmul.mubr.f32.gmra.mxu0 %v1409
        %v1540 = vpop.f32.mrf.mxu0
        %v1541 = vadd.f32 %v1315, %v1540
        %v1542 = vpop.f32.mrf.mxu0
        %v1543 = vadd.f32 %v1315, %v1542
        %1544 = vmatprep.mubr.f32.mxu0 0.0
        %1545 = vmatmul.mubr.f32.gmra.mxu0 %v1412
        %v1546 = vpop.f32.mrf.mxu0
        %v1547 = vadd.f32 %v1320, %v1546
        %v1548 = vpop.f32.mrf.mxu0
        %v1549 = vadd.f32 %v1320, %v1548
        %1550 = vmatprep.mubr.f32.mxu0 0.0
        %1551 = vmatmul.mubr.f32.gmra.mxu0 %v1415
        %v1552 = vpop.f32.mrf.mxu0
        %v1553 = vadd.f32 %v1325, %v1552
        %v1554 = vpop.f32.mrf.mxu0
        %v1555 = vadd.f32 %v1325, %v1554
        %1556 = vmatprep.mubr.f32.mxu0 0.0
        %1557 = vmatmul.mubr.f32.gmra.mxu0 %v1418
        %v1558 = vpop.f32.mrf.mxu0
        %v1559 = vadd.f32 %v1330, %v1558
        %v1560 = vpop.f32.mrf.mxu0
        %v1561 = vadd.f32 %v1330, %v1560
        %1562 = vmatprep.mubr.f32.mxu0 0.0
        %1563 = vmatmul.mubr.f32.gmra.mxu0 %v1421
        %v1564 = vpop.f32.mrf.mxu0
        %v1565 = vadd.f32 %v1335, %v1564
        %v1566 = vpop.f32.mrf.mxu0
        %v1567 = vadd.f32 %v1335, %v1566
        %1568 = vmatprep.mubr.f32.mxu0 0.0
        %1569 = vmatmul.mubr.f32.gmra.mxu0 %v1424
        %v1570 = vpop.f32.mrf.mxu0
        %v1571 = vadd.f32 %v1340, %v1570
        %v1572 = vpop.f32.mrf.mxu0
        %v1573 = vadd.f32 %v1340, %v1572
        %1574 = vmatprep.mubr.f32.mxu0 0.0
        %1575 = vmatmul.mubr.f32.gmra.mxu0 %v1427
        %v1576 = vpop.f32.mrf.mxu0
        %v1577 = vadd.f32 %v1345, %v1576
        %v1578 = vpop.f32.mrf.mxu0
        %v1579 = vadd.f32 %v1345, %v1578
        %1580 = vmatprep.mubr.f32.mxu0 0.0
        %1581 = vmatmul.mubr.f32.gmra.mxu0 %v1430
        %v1582 = vpop.f32.mrf.mxu0
        %v1583 = vadd.f32 %v1350, %v1582
        %v1584 = vpop.f32.mrf.mxu0
        %v1585 = vadd.f32 %v1350, %v1584
        %1586 = vmatprep.mubr.f32.mxu0 0.0
        %1587 = vmatmul.mubr.f32.gmra.mxu0 %v1433
        %v1588 = vpop.f32.mrf.mxu0
        %v1589 = vadd.f32 %v1355, %v1588
        %v1590 = vpop.f32.mrf.mxu0
        %v1591 = vadd.f32 %v1355, %v1590
        %1592 = vmatprep.mubr.f32.mxu0 0.0
        %1593 = vmatmul.mubr.f32.gmra.mxu0 %v1436
        %v1594 = vpop.f32.mrf.mxu0
        %v1595 = vadd.f32 %v1360, %v1594
        %v1596 = vpop.f32.mrf.mxu0
        %v1597 = vadd.f32 %v1360, %v1596
        %1598 = vmatprep.mubr.f32.mxu0 0.0
        %1599 = vmatmul.mubr.f32.gmra.mxu0 %v1439
        %v1600 = vpop.f32.mrf.mxu0
        %v1601 = vadd.f32 %v1365, %v1600
        %v1602 = vpop.f32.mrf.mxu0
        %v1603 = vadd.f32 %v1365, %v1602
        %1604 = vmatprep.mubr.f32.mxu0 0.0
        %1605 = vmatmul.mubr.f32.gmra.mxu0 %v1442
        %v1606 = vpop.f32.mrf.mxu0
        %v1607 = vadd.f32 %v1370, %v1606
        %v1608 = vpop.f32.mrf.mxu0
        %v1609 = vadd.f32 %v1370, %v1608
        %1610 = vmatprep.mubr.f32.mxu0 0.0
        %1611 = vmatmul.mubr.f32.gmra.mxu0 %v1445
        %v1612 = vpop.f32.mrf.mxu0
        %v1613 = vadd.f32 %v1375, %v1612
        %v1614 = vpop.f32.mrf.mxu0
        %v1615 = vadd.f32 %v1375, %v1614
        %1616 = vmatprep.mubr.f32.mxu0 0.0
        %1617 = vmatmul.mubr.f32.gmra.mxu0 %v1448
        %v1618 = vpop.f32.mrf.mxu0
        %v1619 = vadd.f32 %v1380, %v1618
        %v1620 = vpop.f32.mrf.mxu0
        %v1621 = vadd.f32 %v1380, %v1620
        %1622 = vmatprep.mubr.f32.mxu0 0.0
        %1623 = vmatmul.mubr.f32.gmra.mxu0 %v1451
        %v1624 = vpop.f32.mrf.mxu0
        %v1625 = vadd.f32 %v1385, %v1624
        %v1626 = vpop.f32.mrf.mxu0
        %v1627 = vadd.f32 %v1385, %v1626
        %1628 = vmatprep.mubr.f32.mxu0 0.0
        %1629 = vmatmul.mubr.f32.gmra.mxu0 %v1454
        %v1630 = vpop.f32.mrf.mxu0
        %v1631 = vadd.f32 %v1390, %v1630
        %v1632 = vpop.f32.mrf.mxu0
        %v1633 = vadd.f32 %v1390, %v1632
        %1634 = vmatprep.mubr.f32.mxu0 0.0
        %1635 = vmatmul.mubr.f32.gmra.mxu0 %v1457
        %v1636 = vpop.f32.mrf.mxu0
        %v1637 = vadd.f32 %v1395, %v1636
        %v1638 = vpop.f32.mrf.mxu0
        %v1639 = vadd.f32 %v1395, %v1638
        %1640 = vmatprep.mubr.f32.mxu0 0.0
        %1641 = vmatmul.mubr.f32.gmra.mxu0 %v1460
        %v1642 = vpop.f32.mrf.mxu0
        %v1643 = vadd.f32 %v1400, %v1642
        %v1644 = vpop.f32.mrf.mxu0
        %v1645 = vadd.f32 %v1400, %v1644
        %1646 = vdwg.mxu0
        %v1647 = vmax.f32 %v1529, 0.0
        %v1648 = vmax.f32 %v1531, 0.0
        %v1649 = vmax.f32 %v1535, 0.0
        %v1650 = vmax.f32 %v1537, 0.0
        %v1651 = vmax.f32 %v1541, 0.0
        %v1652 = vmax.f32 %v1543, 0.0
        %v1653 = vmax.f32 %v1547, 0.0
        %v1654 = vmax.f32 %v1549, 0.0
        %v1655 = vmax.f32 %v1553, 0.0
        %v1656 = vmax.f32 %v1555, 0.0
        %v1657 = vmax.f32 %v1559, 0.0
        %v1658 = vmax.f32 %v1561, 0.0
        %v1659 = vmax.f32 %v1565, 0.0
        %v1660 = vmax.f32 %v1567, 0.0
        %v1661 = vmax.f32 %v1571, 0.0
        %v1662 = vmax.f32 %v1573, 0.0
        %v1663 = vmul.f32 %v1655, %v1577
        %v1664 = vmul.f32 %v1656, %v1579
        %v1665 = vmul.f32 %v1657, %v1583
        %v1666 = vmul.f32 %v1658, %v1585
        %v1667 = vmul.f32 %v1659, %v1589
        %v1668 = vmul.f32 %v1660, %v1591
        %v1669 = vmul.f32 %v1661, %v1595
        %v1670 = vmul.f32 %v1662, %v1597
        %v1671 = vadd.f32 %v1663, %v1664
        %1672 = vadd.xlane.f32.xlu0 %v1671
        %v1673 = vpop.xlane.xlu0 %1672
        %v1674 = vadd.f32 %v1665, %v1666
        %1675 = vadd.xlane.f32.xlu0 %v1674
        %v1676 = vpop.xlane.xlu0 %1675
        %v1677 = vadd.f32 %v1667, %v1668
        %1678 = vadd.xlane.f32.xlu0 %v1677
        %v1679 = vpop.xlane.xlu0 %1678
        %v1680 = vadd.f32 %v1669, %v1670
        %1681 = vadd.xlane.f32.xlu0 %v1680
        %v1682 = vpop.xlane.xlu0 %1681
        %v1683 = vadd.f32 %v1655, %v1656
        %1684 = vadd.xlane.f32.xlu0 %v1683
        %v1685 = vpop.xlane.xlu0 %1684
        %v1686 = vadd.f32 %v1657, %v1658
        %1687 = vadd.xlane.f32.xlu0 %v1686
        %v1688 = vpop.xlane.xlu0 %1687
        %v1689 = vadd.f32 %v1659, %v1660
        %1690 = vadd.xlane.f32.xlu0 %v1689
        %v1691 = vpop.xlane.xlu0 %1690
        %v1692 = vadd.f32 %v1661, %v1662
        %1693 = vadd.xlane.f32.xlu0 %v1692
        %v1694 = vpop.xlane.xlu0 %1693
        %v1695 = vadd.f32 %v1685, 1e-06
        %v1696 = vadd.f32 %v1688, 1e-06
        %v1697 = vadd.f32 %v1691, 1e-06
        %v1698 = vadd.f32 %v1694, 1e-06
        %v1699 = vmul.f32 %v1647, %v1695
        %v1700 = vmul.f32 %v1648, %v1695
        %v1701 = vmul.f32 %v1649, %v1696
        %v1702 = vmul.f32 %v1650, %v1696
        %v1703 = vmul.f32 %v1651, %v1697
        %v1704 = vmul.f32 %v1652, %v1697
        %v1705 = vmul.f32 %v1653, %v1698
        %v1706 = vmul.f32 %v1654, %v1698
        %v1707 = vadd.f32 %v1699, %v1701
        %v1708 = vadd.f32 %v1707, %v1703
        %v1709 = vadd.f32 %v1708, %v1705
        %v1710 = vrot.slane %v1709, 4
        %v1711 = vadd.f32 %v1709, %v1710
        %v1712 = vrot.slane %v1711, 2
        %v1713 = vadd.f32 %v1711, %v1712
        %v1714 = vrot.slane %v1713, 1
        %v1715 = vadd.f32 %v1713, %v1714
        %v1716 = vadd.f32 %v1700, %v1702
        %v1717 = vadd.f32 %v1716, %v1704
        %v1718 = vadd.f32 %v1717, %v1706
        %v1719 = vrot.slane %v1718, 4
        %v1720 = vadd.f32 %v1718, %v1719
        %v1721 = vrot.slane %v1720, 2
        %v1722 = vadd.f32 %v1720, %v1721
        %v1723 = vrot.slane %v1722, 1
        %v1724 = vadd.f32 %v1722, %v1723
        %v1725 = vmul.f32 %v1647, %v1673
        %v1726 = vmul.f32 %v1648, %v1673
        %v1727 = vmul.f32 %v1649, %v1676
        %v1728 = vmul.f32 %v1650, %v1676
        %v1729 = vmul.f32 %v1651, %v1679
        %v1730 = vmul.f32 %v1652, %v1679
        %v1731 = vmul.f32 %v1653, %v1682
        %v1732 = vmul.f32 %v1654, %v1682
        %v1733 = vrcp.pop %v1715
        %v1734 = vrcp.pop %v1724
        %v1735 = vmul.f32 %v1725, %v1733
        %v1736 = vmul.f32 %v1726, %v1734
        %v1737 = vmul.f32 %v1727, %v1733
        %v1738 = vmul.f32 %v1728, %v1734
        %v1739 = vmul.f32 %v1729, %v1733
        %v1740 = vmul.f32 %v1730, %v1734
        %v1741 = vmul.f32 %v1731, %v1733
        %v1742 = vmul.f32 %v1732, %v1734
        %1743 = vmatprep.subr.mxu0 0.0
        %1744 = vmatpush1.xpose.msra.mxu0 0.0
        %1745 = vmatprep.subr.mxu0 0.0
        %1746 = vmatpush1.xpose.msra.mxu0 0.0
        %1747 = vmatprep.subr.mxu0 0.0
        %1748 = vmatpush1.xpose.msra.mxu0 0.0
        %1749 = vmatprep.subr.mxu0 0.0
        %1750 = vmatpush1.xpose.msra.mxu0 0.0
        %1751 = vmatprep.subr.mxu0 0.0
        %1752 = vmatpush1.xpose.msra.mxu0 0.0
        %1753 = vmatprep.subr.mxu0 0.0
        %1754 = vmatpush1.xpose.msra.mxu0 0.0
        %1755 = vmatprep.subr.mxu0 0.0
        %1756 = vmatpush1.xpose.msra.mxu0 0.0
        %1757 = vmatprep.subr.mxu0 0.0
        %1758 = vmatpush1.xpose.msra.mxu0 0.0
        %1759 = vmatprep.subr.mxu0 0.0
        %1760 = vmatpush1.xpose.msra.mxu0 0.0
        %1761 = vmatprep.subr.mxu0 0.0
        %1762 = vmatpush1.xpose.msra.mxu0 0.0
        %1763 = vmatprep.subr.mxu0 0.0
        %1764 = vmatpush1.xpose.msra.mxu0 0.0
        %1765 = vmatprep.subr.mxu0 0.0
        %1766 = vmatpush1.xpose.msra.mxu0 0.0
        %1767 = vmatprep.subr.mxu0 %v1645
        %1768 = vmatpush1.xpose.msra.mxu0 %v1643
        %1769 = vmatprep.subr.mxu0 %v1639
        %1770 = vmatpush1.xpose.msra.mxu0 %v1637
        %1771 = vmatprep.subr.mxu0 %v1633
        %1772 = vmatpush1.xpose.msra.mxu0 %v1631
        %1773 = vmatprep.subr.mxu0 %v1627
        %1774 = vmatpush1.xpose.msra.mxu0 %v1625
        %1775 = vmatprep.subr.mxu0 0.0
        %1776 = vmatpush2.xpose.msra.mxu0 0.0
        %1777 = vmatprep.subr.mxu0 0.0
        %1778 = vmatpush2.xpose.msra.mxu0 0.0
        %1779 = vmatprep.subr.mxu0 0.0
        %1780 = vmatpush2.xpose.msra.mxu0 0.0
        %1781 = vmatprep.subr.mxu0 0.0
        %1782 = vmatpush2.xpose.msra.mxu0 0.0
        %1783 = vmatprep.subr.mxu0 0.0
        %1784 = vmatpush2.xpose.msra.mxu0 0.0
        %1785 = vmatprep.subr.mxu0 0.0
        %1786 = vmatpush2.xpose.msra.mxu0 0.0
        %1787 = vmatprep.subr.mxu0 0.0
        %1788 = vmatpush2.xpose.msra.mxu0 0.0
        %1789 = vmatprep.subr.mxu0 0.0
        %1790 = vmatpush2.xpose.msra.mxu0 0.0
        %1791 = vmatprep.subr.mxu0 0.0
        %1792 = vmatpush2.xpose.msra.mxu0 0.0
        %1793 = vmatprep.subr.mxu0 0.0
        %1794 = vmatpush2.xpose.msra.mxu0 0.0
        %1795 = vmatprep.subr.mxu0 0.0
        %1796 = vmatpush2.xpose.msra.mxu0 0.0
        %1797 = vmatprep.subr.mxu0 0.0
        %1798 = vmatpush2.xpose.msra.mxu0 0.0
        %1799 = vmatprep.subr.mxu0 0.0
        %1800 = vmatpush2.xpose.msra.mxu0 0.0
        %1801 = vmatprep.subr.mxu0 0.0
        %1802 = vmatpush2.xpose.msra.mxu0 0.0
        %1803 = vmatprep.subr.mxu0 0.0
        %1804 = vmatpush2.xpose.msra.mxu0 0.0
        %1805 = vmatprep.subr.mxu0 0.0
        %1806 = vmatpush2.xpose.msra.mxu0 0.0
        %1807 = vmatprep.mubr.f32.mxu0 %v1603
        %1808 = vmatmul.mubr.f32.gmra.mxu0 %v1601
        %v1809 = vpop.f32.mrf.mxu0
        %v1810 = vadd.f32 0.0, %v1809
        %v1811 = vpop.f32.mrf.mxu0
        %1812 = vmatprep.mubr.f32.mxu0 %v1609
        %1813 = vmatmul.mubr.f32.gmra.mxu0 %v1607
        %v1814 = vpop.f32.mrf.mxu0
        %v1815 = vadd.f32 0.0, %v1814
        %v1816 = vpop.f32.mrf.mxu0
        %1817 = vmatprep.mubr.f32.mxu0 %v1615
        %1818 = vmatmul.mubr.f32.gmra.mxu0 %v1613
        %v1819 = vpop.f32.mrf.mxu0
        %v1820 = vadd.f32 0.0, %v1819
        %v1821 = vpop.f32.mrf.mxu0
        %1822 = vmatprep.mubr.f32.mxu0 %v1621
        %1823 = vmatmul.mubr.f32.gmra.mxu0 %v1619
        %v1824 = vpop.f32.mrf.mxu0
        %v1825 = vadd.f32 0.0, %v1824
        %v1826 = vpop.f32.mrf.mxu0
        %1827 = vdwg.mxu0
        %v1828 = vsel %vm549, %v1810, -inf
        %1829 = vmax.xlane.f32.xlu0 %v1828
        %v1830 = vpop.xlane.xlu0 %1829
        %v1831 = vsel %vm549, %v1815, -inf
        %1832 = vmax.xlane.f32.xlu0 %v1831
        %v1833 = vpop.xlane.xlu0 %1832
        %v1834 = vsel %vm549, %v1820, -inf
        %1835 = vmax.xlane.f32.xlu0 %v1834
        %v1836 = vpop.xlane.xlu0 %1835
        %v1837 = vsel %vm549, %v1825, -inf
        %1838 = vmax.xlane.f32.xlu0 %v1837
        %v1839 = vpop.xlane.xlu0 %1838
        %v1840 = vsub.f32 %v1810, %v1830
        %v1841 = vsub.f32 %v1815, %v1833
        %v1842 = vsub.f32 %v1820, %v1836
        %v1843 = vsub.f32 %v1825, %v1839
        %v1844 = vmul.f32 %v1840, 1.442695
        %v1845 = vpow.pop %v1844
        %v1846 = vmul.f32 %v1841, 1.442695
        %v1847 = vpow.pop %v1846
        %v1848 = vmul.f32 %v1842, 1.442695
        %v1849 = vpow.pop %v1848
        %v1850 = vmul.f32 %v1843, 1.442695
        %v1851 = vpow.pop %v1850
        %v1852 = vsel %vm549, %v1845, 0.0
        %1853 = vadd.xlane.f32.xlu0 %v1852
        %v1854 = vpop.xlane.xlu0 %1853
        %v1855 = vsel %vm549, %v1847, 0.0
        %1856 = vadd.xlane.f32.xlu0 %v1855
        %v1857 = vpop.xlane.xlu0 %1856
        %v1858 = vsel %vm549, %v1849, 0.0
        %1859 = vadd.xlane.f32.xlu0 %v1858
        %v1860 = vpop.xlane.xlu0 %1859
        %v1861 = vsel %vm549, %v1851, 0.0
        %1862 = vadd.xlane.f32.xlu0 %v1861
        %v1863 = vpop.xlane.xlu0 %1862
        %v1864 = vrcp.pop %v1854
        %v1865 = vrcp.pop %v1857
        %v1866 = vrcp.pop %v1860
        %v1867 = vrcp.pop %v1863
        %v1868 = vmul.f32 %v1845, %v1864
        %v1869 = vmul.f32 %v1847, %v1865
        %v1870 = vmul.f32 %v1849, %v1866
        %v1871 = vmul.f32 %v1851, %v1867
        %1872 = vxpose.xlu0.b32.start [1/16] %v1868, 128
        %1873 = vxpose.xlu0.b32.cont [2/16] %v1869, 128
        %1874 = vxpose.xlu0.b32.cont [3/16] %v1870, 128
        %1875 = vxpose.xlu0.b32.cont [4/16] %v1871, 128
        %1876 = vxpose.xlu0.b32.cont [5/16] 0.0, 128
        %1877 = vxpose.xlu0.b32.cont [6/16] 0.0, 128
        %1878 = vxpose.xlu0.b32.cont [7/16] 0.0, 128
        %1879 = vxpose.xlu0.b32.cont [8/16] 0.0, 128
        %1880 = vxpose.xlu0.b32.cont [9/16] 0.0, 128
        %1881 = vxpose.xlu0.b32.cont [10/16] 0.0, 128
        %1882 = vxpose.xlu0.b32.cont [11/16] 0.0, 128
        %1883 = vxpose.xlu0.b32.cont [12/16] 0.0, 128
        %1884 = vxpose.xlu0.b32.cont [13/16] 0.0, 128
        %1885 = vxpose.xlu0.b32.cont [14/16] 0.0, 128
        %1886 = vxpose.xlu0.b32.cont [15/16] 0.0, 128
        %1887 = vxpose.xlu0.b32.end [16/16] 0.0, 128
        %v1888 = vpop.trf.xlu0
        %v1889 = vpop.trf.xlu0
        %v1890 = vpop.trf.xlu0
        %v1891 = vpop.trf.xlu0
        %v1892 = vpop.trf.xlu0
        %v1893 = vpop.trf.xlu0
        %v1894 = vpop.trf.xlu0
        %v1895 = vpop.trf.xlu0
        %v1896 = vpop.trf.xlu0
        %v1897 = vpop.trf.xlu0
        %v1898 = vpop.trf.xlu0
        %v1899 = vpop.trf.xlu0
        %v1900 = vpop.trf.xlu0
        %v1901 = vpop.trf.xlu0
        %v1902 = vpop.trf.xlu0
        %v1903 = vpop.trf.xlu0
        %v1905 = vsel %vm549, %v1888, 0
        %v1908 = vsel %vm549, %v1889, 0
        %v1911 = vsel %vm549, %v1890, 0
        %v1914 = vsel %vm549, %v1891, 0
        %1916 = vmatprep.subr.mxu0 0.0
        %1917 = vmatpush1.msra.mxu0 0.0
        %1918 = vmatprep.subr.mxu0 0.0
        %1919 = vmatpush1.msra.mxu0 0.0
        %1920 = vmatprep.subr.mxu0 0.0
        %1921 = vmatpush1.msra.mxu0 0.0
        %1922 = vmatprep.subr.mxu0 0.0
        %1923 = vmatpush1.msra.mxu0 0.0
        %1924 = vmatprep.subr.mxu0 0.0
        %1925 = vmatpush1.msra.mxu0 0.0
        %1926 = vmatprep.subr.mxu0 0.0
        %1927 = vmatpush1.msra.mxu0 0.0
        %1928 = vmatprep.subr.mxu0 0.0
        %1929 = vmatpush1.msra.mxu0 0.0
        %1930 = vmatprep.subr.mxu0 0.0
        %1931 = vmatpush1.msra.mxu0 0.0
        %1932 = vmatprep.subr.mxu0 0.0
        %1933 = vmatpush1.msra.mxu0 0.0
        %1934 = vmatprep.subr.mxu0 0.0
        %1935 = vmatpush1.msra.mxu0 0.0
        %1936 = vmatprep.subr.mxu0 0.0
        %1937 = vmatpush1.msra.mxu0 0.0
        %1938 = vmatprep.subr.mxu0 0.0
        %1939 = vmatpush1.msra.mxu0 0.0
        %1940 = vmatprep.subr.mxu0 %v1742
        %1941 = vmatpush1.msra.mxu0 %v1741
        %1942 = vmatprep.subr.mxu0 %v1740
        %1943 = vmatpush1.msra.mxu0 %v1739
        %1944 = vmatprep.subr.mxu0 %v1738
        %1945 = vmatpush1.msra.mxu0 %v1737
        %1946 = vmatprep.subr.mxu0 %v1736
        %1947 = vmatpush1.msra.mxu0 %v1735
        %1948 = vmatprep.subr.mxu0 0.0
        %1949 = vmatpush2.msra.mxu0 0.0
        %1950 = vmatprep.subr.mxu0 0.0
        %1951 = vmatpush2.msra.mxu0 0.0
        %1952 = vmatprep.subr.mxu0 0.0
        %1953 = vmatpush2.msra.mxu0 0.0
        %1954 = vmatprep.subr.mxu0 0.0
        %1955 = vmatpush2.msra.mxu0 0.0
        %1956 = vmatprep.subr.mxu0 0.0
        %1957 = vmatpush2.msra.mxu0 0.0
        %1958 = vmatprep.subr.mxu0 0.0
        %1959 = vmatpush2.msra.mxu0 0.0
        %1960 = vmatprep.subr.mxu0 0.0
        %1961 = vmatpush2.msra.mxu0 0.0
        %1962 = vmatprep.subr.mxu0 0.0
        %1963 = vmatpush2.msra.mxu0 0.0
        %1964 = vmatprep.subr.mxu0 0.0
        %1965 = vmatpush2.msra.mxu0 0.0
        %1966 = vmatprep.subr.mxu0 0.0
        %1967 = vmatpush2.msra.mxu0 0.0
        %1968 = vmatprep.subr.mxu0 0.0
        %1969 = vmatpush2.msra.mxu0 0.0
        %1970 = vmatprep.subr.mxu0 0.0
        %1971 = vmatpush2.msra.mxu0 0.0
        %1972 = vmatprep.subr.mxu0 0.0
        %1973 = vmatpush2.msra.mxu0 0.0
        %1974 = vmatprep.subr.mxu0 0.0
        %1975 = vmatpush2.msra.mxu0 0.0
        %1976 = vmatprep.subr.mxu0 0.0
        %1977 = vmatpush2.msra.mxu0 0.0
        %1978 = vmatprep.subr.mxu0 0.0
        %1979 = vmatpush2.msra.mxu0 0.0
        %1980 = vmatprep.mubr.f32.mxu0 0.0
        %1981 = vmatmul.mubr.f32.gmra.mxu0 %v1905
        %v1982 = vpop.f32.mrf.mxu0
        %v1983 = vadd.f32 0.0, %v1982
        %v1984 = vpop.f32.mrf.mxu0
        %v1985 = vadd.f32 0.0, %v1984
        %1986 = vmatprep.mubr.f32.mxu0 0.0
        %1987 = vmatmul.mubr.f32.gmra.mxu0 %v1908
        %v1988 = vpop.f32.mrf.mxu0
        %v1989 = vadd.f32 0.0, %v1988
        %v1990 = vpop.f32.mrf.mxu0
        %v1991 = vadd.f32 0.0, %v1990
        %1992 = vmatprep.mubr.f32.mxu0 0.0
        %1993 = vmatmul.mubr.f32.gmra.mxu0 %v1911
        %v1994 = vpop.f32.mrf.mxu0
        %v1995 = vadd.f32 0.0, %v1994
        %v1996 = vpop.f32.mrf.mxu0
        %v1997 = vadd.f32 0.0, %v1996
        %1998 = vmatprep.mubr.f32.mxu0 0.0
        %1999 = vmatmul.mubr.f32.gmra.mxu0 %v1914
        %v2000 = vpop.f32.mrf.mxu0
        %v2001 = vadd.f32 0.0, %v2000
        %v2002 = vpop.f32.mrf.mxu0
        %v2003 = vadd.f32 0.0, %v2002
        %2004 = vdwg.mxu0
        %s2005 = sld [smem:[#allocation2 + $0x1]]
        %v2006 = vstv %s2005
        %v2007 = vmul.f32 %v2006, %v1983
        %v2008 = vmul.f32 %v2006, %v1985
        %v2009 = vmul.f32 %v2006, %v1989
        %v2010 = vmul.f32 %v2006, %v1991
        %v2011 = vmul.f32 %v2006, %v1995
        %v2012 = vmul.f32 %v2006, %v1997
        %v2013 = vmul.f32 %v2006, %v2001
        %v2014 = vmul.f32 %v2006, %v2003
        %v2015 = vadd.f32 %v1252, %v2007
        %v2016 = vadd.f32 %v1253, %v2008
        %v2017 = vadd.f32 %v1254, %v2009
        %v2018 = vadd.f32 %v1255, %v2010
        %v2019 = vadd.f32 %v1256, %v2011
        %v2020 = vadd.f32 %v1257, %v2012
        %v2021 = vadd.f32 %v1258, %v2013
        %v2022 = vadd.f32 %v1259, %v2014
        %s2023 = scalar_lea.vmem %s4, 32
        %v2024 = vld [vmem:[%s2023] sm:$0xff]
        %v2025 = vld [vmem:[%s2023 + $0x8] sm:$0xff]
        %v2026 = vld [vmem:[%s2023 + $0x10] sm:$0xff]
        %v2027 = vld [vmem:[%s2023 + $0x18] sm:$0xff]
        %2029 = vset.pattern.permute.xlu0 0
        %2030 = vperm.xlu0 %2029, %v2024
        %v2031 = vpop.permute.xlu0 %2030
        %2034 = vset.pattern.permute.xlu0 0
        %2035 = vperm.xlu0 %2034, %v2025
        %v2036 = vpop.permute.xlu0 %2035
        %2039 = vset.pattern.permute.xlu0 0
        %2040 = vperm.xlu0 %2039, %v2026
        %v2041 = vpop.permute.xlu0 %2040
        %2044 = vset.pattern.permute.xlu0 0
        %2045 = vperm.xlu0 %2044, %v2027
        %v2046 = vpop.permute.xlu0 %2045
        %v2048 = vmul.f32 %v2015, %v2031
        %v2049 = vmul.f32 %v2016, %v2031
        %v2050 = vmul.f32 %v2017, %v2036
        %v2051 = vmul.f32 %v2018, %v2036
        %v2052 = vmul.f32 %v2019, %v2041
        %v2053 = vmul.f32 %v2020, %v2041
        %v2054 = vmul.f32 %v2021, %v2046
        %v2055 = vmul.f32 %v2022, %v2046
        %s2056 = scalar_lea.vmem %s5, 32
        %v2057 = vld [vmem:[%s2056] sm:$0xff]
        %v2058 = vld [vmem:[%s2056 + $0x8] sm:$0xff]
        %v2059 = vld [vmem:[%s2056 + $0x10] sm:$0xff]
        %v2060 = vld [vmem:[%s2056 + $0x18] sm:$0xff]
        %2062 = vset.pattern.permute.xlu0 0
        %2063 = vperm.xlu0 %2062, %v2057
        %v2064 = vpop.permute.xlu0 %2063
        %2067 = vset.pattern.permute.xlu0 0
        %2068 = vperm.xlu0 %2067, %v2058
        %v2069 = vpop.permute.xlu0 %2068
        %2072 = vset.pattern.permute.xlu0 0
        %2073 = vperm.xlu0 %2072, %v2059
        %v2074 = vpop.permute.xlu0 %2073
        %2077 = vset.pattern.permute.xlu0 0
        %2078 = vperm.xlu0 %2077, %v2060
        %v2079 = vpop.permute.xlu0 %2078
        %v2081 = vadd.f32 %v2048, %v2064
        %v2082 = vadd.f32 %v2049, %v2064
        %v2083 = vadd.f32 %v2050, %v2069
        %v2084 = vadd.f32 %v2051, %v2069
        %v2085 = vadd.f32 %v2052, %v2074
        %v2086 = vadd.f32 %v2053, %v2074
        %v2087 = vadd.f32 %v2054, %v2079
        %v2088 = vadd.f32 %v2055, %v2079
        %v2089 = vmax.f32 %v2081, 0.0
        %v2090 = vmax.f32 %v2082, 0.0
        %v2091 = vmax.f32 %v2083, 0.0
        %v2092 = vmax.f32 %v2084, 0.0
        %v2093 = vmax.f32 %v2085, 0.0
        %v2094 = vmax.f32 %v2086, 0.0
        %v2095 = vmax.f32 %v2087, 0.0
        %v2096 = vmax.f32 %v2088, 0.0
        %v2097 = vld [vmem:[%s6] sm:$0x3f]
        %v2098 = vld [vmem:[%s7] sm:$0x3f]
        %2100 = vset.pattern.permute.xlu0 0
        %2101 = vperm.xlu0 %2100, %v2098
        %v2102 = vpop.permute.xlu0 %2101
        %v2105 = vsel %vm549, %v2097, 0
        %2107 = vmatprep.subr.mxu0 0.0
        %2108 = vmatpush1.msra.mxu0 0.0
        %2109 = vmatprep.subr.mxu0 0.0
        %2110 = vmatpush1.msra.mxu0 0.0
        %2111 = vmatprep.subr.mxu0 0.0
        %2112 = vmatpush1.msra.mxu0 0.0
        %2113 = vmatprep.subr.mxu0 0.0
        %2114 = vmatpush1.msra.mxu0 0.0
        %2115 = vmatprep.subr.mxu0 0.0
        %2116 = vmatpush1.msra.mxu0 0.0
        %2117 = vmatprep.subr.mxu0 0.0
        %2118 = vmatpush1.msra.mxu0 0.0
        %2119 = vmatprep.subr.mxu0 0.0
        %2120 = vmatpush1.msra.mxu0 0.0
        %2121 = vmatprep.subr.mxu0 0.0
        %2122 = vmatpush1.msra.mxu0 0.0
        %2123 = vmatprep.subr.mxu0 0.0
        %2124 = vmatpush1.msra.mxu0 0.0
        %2125 = vmatprep.subr.mxu0 0.0
        %2126 = vmatpush1.msra.mxu0 0.0
        %2127 = vmatprep.subr.mxu0 0.0
        %2128 = vmatpush1.msra.mxu0 0.0
        %2129 = vmatprep.subr.mxu0 0.0
        %2130 = vmatpush1.msra.mxu0 0.0
        %2131 = vmatprep.subr.mxu0 %v2096
        %2132 = vmatpush1.msra.mxu0 %v2095
        %2133 = vmatprep.subr.mxu0 %v2094
        %2134 = vmatpush1.msra.mxu0 %v2093
        %2135 = vmatprep.subr.mxu0 %v2092
        %2136 = vmatpush1.msra.mxu0 %v2091
        %2137 = vmatprep.subr.mxu0 %v2090
        %2138 = vmatpush1.msra.mxu0 %v2089
        %2139 = vmatprep.subr.mxu0 0.0
        %2140 = vmatpush2.msra.mxu0 0.0
        %2141 = vmatprep.subr.mxu0 0.0
        %2142 = vmatpush2.msra.mxu0 0.0
        %2143 = vmatprep.subr.mxu0 0.0
        %2144 = vmatpush2.msra.mxu0 0.0
        %2145 = vmatprep.subr.mxu0 0.0
        %2146 = vmatpush2.msra.mxu0 0.0
        %2147 = vmatprep.subr.mxu0 0.0
        %2148 = vmatpush2.msra.mxu0 0.0
        %2149 = vmatprep.subr.mxu0 0.0
        %2150 = vmatpush2.msra.mxu0 0.0
        %2151 = vmatprep.subr.mxu0 0.0
        %2152 = vmatpush2.msra.mxu0 0.0
        %2153 = vmatprep.subr.mxu0 0.0
        %2154 = vmatpush2.msra.mxu0 0.0
        %2155 = vmatprep.subr.mxu0 0.0
        %2156 = vmatpush2.msra.mxu0 0.0
        %2157 = vmatprep.subr.mxu0 0.0
        %2158 = vmatpush2.msra.mxu0 0.0
        %2159 = vmatprep.subr.mxu0 0.0
        %2160 = vmatpush2.msra.mxu0 0.0
        %2161 = vmatprep.subr.mxu0 0.0
        %2162 = vmatpush2.msra.mxu0 0.0
        %2163 = vmatprep.subr.mxu0 0.0
        %2164 = vmatpush2.msra.mxu0 0.0
        %2165 = vmatprep.subr.mxu0 0.0
        %2166 = vmatpush2.msra.mxu0 0.0
        %2167 = vmatprep.subr.mxu0 0.0
        %2168 = vmatpush2.msra.mxu0 0.0
        %2169 = vmatprep.subr.mxu0 0.0
        %2170 = vmatpush2.msra.mxu0 0.0
        %2171 = vmatprep.mubr.f32.mxu0 0.0
        %2172 = vmatmul.mubr.f32.gmra.mxu0 %v2105
        %v2173 = vpop.f32.mrf.mxu0
        %v2174 = vadd.f32 %v2102, %v2173
        %v2175 = vpop.f32.mrf.mxu0
        %v2176 = vadd.f32 %v2102, %v2175
        %2177 = vdwg.mxu0
        %2178 = vst [vmem:[%s384] sm:$0x3f] %v2174
        %2179 = vst [vmem:[%s384 + $0x8] sm:$0x3f] %v2176
        %v2180 = vadd.f32 %v2089, %v385
        %v2181 = vadd.f32 %v2090, %v386
        %v2182 = vadd.f32 %v2091, %v387
        %v2183 = vadd.f32 %v2092, %v388
        %v2184 = vadd.f32 %v2093, %v389
        %v2185 = vadd.f32 %v2094, %v390
        %v2186 = vadd.f32 %v2095, %v391
        %v2187 = vadd.f32 %v2096, %v392
        %2188 = vst [vmem:[%s374] sm:$0xff] %v2180
        %2189 = vst [vmem:[%s374 + $0x8] sm:$0xff] %v2181
        %2190 = vst [vmem:[%s374 + $0x10] sm:$0xff] %v2182
        %2191 = vst [vmem:[%s374 + $0x18] sm:$0xff] %v2183
        %2192 = vst [vmem:[%s374 + $0x20] sm:$0xff] %v2184
        %2193 = vst [vmem:[%s374 + $0x28] sm:$0xff] %v2185
        %2194 = vst [vmem:[%s374 + $0x30] sm:$0xff] %v2186
        %2195 = vst [vmem:[%s374 + $0x38] sm:$0xff] %v2187
        %p2196 = scmp.lt.s32.totalorder %s26, 1
        %s2197 = scalar_select %p2196, %s26, 1
        %s2198 = smul.addr %s2197, 2
        %s2199 = smul.addr %s2198, 8
        %s2200 = scalar_lea.vmem %s9, %s2199
        %s2201 = sand.u32 %s254, 1
        %s2202 = scalar_lea.sflag [#allocation3], %s2201
        %s2203 = sand.u32 %s254, 1
        %s2204 = smul.addr %s2203, 64
        %s2205 = scalar_lea.vmem [#allocation5], %s2204
        // Predicated region
        $region61: #{tpu_custom_call.1} parent=55 // pred_check
          %p2206 = pneg %p238
        $region62: #{tpu_custom_call.1} parent=55 // pred_check_branch
          %2208 = sbr.rel (%p2206) target = $region64
        $region63: #{tpu_custom_call.1} parent=55 // pred_region
          _
        $region64: #{tpu_custom_call.1} parent=55 // pred_fallthru
          _
        // Predicated region
        $region65: #{tpu_custom_call.1} parent=55 // pred_check
          %p2209 = pneg %p264
        $region66: #{tpu_custom_call.1} parent=55 // pred_check_branch
          %2211 = sbr.rel (%p2209) target = $region68
        $region67: #{tpu_custom_call.1} parent=55 // pred_region
          %s2213 = ssub.s32 1024, 1024
          %2214 = vsyncadd %s2202, %s2213
          %s2215 = smul.addr %s26, 8
          %s2216 = smul.addr %s2215, 128
          %s2217 = scalar_lea.hbm %s10, %s2216
          %s2218 = sshll.u32 %s2205, 4
          %s2219 = int_to_ptr.vmem [resolvable:$true] %s2218
          %2224 = dma.vmem_to_hbm [thread:$0]  %s2219, 1024, %s2217, %s2202, 256, 256, 16
        $region68: #{tpu_custom_call.1} parent=55 // pred_fallthru
          _
      $region56: #{tpu_custom_call.1} parent=5 // pred_fallthru
        _
      %p2225 = scmp.le.s32.totalorder 2, %s21
      // Predicated region
      $region69: #{tpu_custom_call.1} parent=5 // pred_check
        %p2226 = pneg %p2225
      $region70: #{tpu_custom_call.1} parent=5 // pred_check_branch
        %2228 = sbr.rel (%p2226) target = $region72
      $region71: #{tpu_custom_call.1} parent=5 // pred_region
        %s2229 = ssub.s32 %s21, 2
        // Predicated region
        $region73: #{tpu_custom_call.1} parent=71 // pred_check
          %p2230 = pneg %p244
        $region74: #{tpu_custom_call.1} parent=71 // pred_check_branch
          %2232 = sbr.rel (%p2230) target = $region76
        $region75: #{tpu_custom_call.1} parent=71 // pred_region
          %p2233 = scmp.lt.s32.totalorder %s27, 1
          %s2234 = scalar_select %p2233, %s27, 1
          %s2235 = smul.addr %s2234, 2
          %s2236 = smul.addr %s2235, 8
          %s2237 = scalar_lea.vmem %s9, %s2236
        $region76: #{tpu_custom_call.1} parent=71 // pred_fallthru
          _
        // Predicated region
        $region77: #{tpu_custom_call.1} parent=71 // pred_check
          %p2238 = pneg %p270
        $region78: #{tpu_custom_call.1} parent=71 // pred_check_branch
          %2240 = sbr.rel (%p2238) target = $region80
        $region79: #{tpu_custom_call.1} parent=71 // pred_region
          %s2241 = sand.u32 %s255, 1
          %s2242 = scalar_lea.sflag [#allocation3], %s2241
          %s2243 = sand.u32 %s255, 1
          %s2244 = smul.addr %s2243, 64
          %s2245 = scalar_lea.vmem [#allocation5], %s2244
          %2246 = dma.done %s2242, 1024
        $region80: #{tpu_custom_call.1} parent=71 // pred_fallthru
          _
      $region72: #{tpu_custom_call.1} parent=5 // pred_fallthru
        _
    $region6: #{tpu_custom_call.1} parent=1 // loop_footer
      %s25 = sadd.s32 1, %s21
    $region7: #{tpu_custom_call.1} parent=1 // loop_footer_branch
      %20 = sbr.rel target = $region3
    $region8: #{tpu_custom_call.1} parent=1 // loop_exit
      _
    %2247 = vsyncpa [#allocation3], 1
    %s2248 = scalar_lea.sflag [#allocation3], 1
    %2249 = vsyncpa %s2248, 1
    %2250 = vsyncpa [#allocation4], 1
    %s2251 = scalar_lea.sflag [#allocation4], 1
    %2252 = vsyncpa %s2251, 1

</llo_original>
